<compile_context>
chip_gen: v7x
topology: tpu7x:2x2x1
jax: 0.10.0
libtpu: 0.0.40
codegen_flags: <defaults>
</compile_context>

<pallas_src>
import functools
import math

import numpy as np
import jax
import jax.numpy as jnp
from jax.experimental import pallas as pl
from jax.experimental.pallas import tpu as pltpu

# ---- hyperparameters (mirror HierarchicalSPPModel defaults, small image) ----
NUM_CLASSES = 4
NUM_LEVELS = 2
EMBED_DIM = 48
OUT_CHANNELS = 128
POOL_SIZES = (1, 2, 4)
SPP_LEN = sum(OUT_CHANNELS * s * s for s in POOL_SIZES)      # 2688
D_MODEL = SPP_LEN                                            # 2688
NHEAD = 8
DH = D_MODEL // NHEAD                                        # 336
DIM_FF = 2048
NUM_PATCHES = sum(4 ** l for l in range(NUM_LEVELS + 1))     # 21
N_POOL_COLS = sum(s * s for s in POOL_SIZES)                 # 21

# ~12 MiB per weight tile: double-buffered working set stays < ~25 MiB, which
# fits v7x's 64 MiB VMEM with headroom while halving grid-step count vs the
# previous 5 MiB budget on v5e/v6e.
WEIGHT_TILE_BUDGET = 12 * 1024 * 1024
VMEM_LIMIT = 48 * 1024 * 1024          # explicit (v5e default is only 16 MiB)


# =====================================================================
# Conv + SPP kernels
# =====================================================================

def make_conv_spp_kernel(shifts):
    """Conv2d(3->64,3x3,p=1)+ReLU -> Conv2d(64->128,3x3,p=1)+ReLU -> SPP.

    Each 3x3 conv: 9 lane-rolls (+ border mask) build a (9*Cin, LT) tap stack,
    then a single (Cout, 9*Cin) @ (9*Cin, LT) MXU matmul.  SPP is one matmul
    against a (lane-dense, zero-padded) block-diagonal pooling matrix.
    """
    def kernel(x_ref, w1_ref, b1_ref, w2_ref, b2_ref, m_ref, pm_ref, o_ref):
        def conv3x3(inp, w_ref, b_ref):
            taps = []
            for t in range(9):
                if t == 4:                       # center tap: no shift, no mask
                    taps.append(inp)
                else:
                    r = pltpu.roll(inp, shifts[t], axis=1)
                    taps.append(r * m_ref[t:t + 1, :])
            stacked = jnp.concatenate(taps, axis=0)          # (9*Cin, LT)
            y = jnp.dot(w_ref[...], stacked,
                        preferred_element_type=jnp.float32)
            return jnp.maximum(y + b_ref[...], 0.0)

        h = conv3x3(x_ref[...], w1_ref, b1_ref)              # (64, LT)
        y = conv3x3(h, w2_ref, b2_ref)                       # (128, LT)
        # block-diag avg-pool matmul -> (128, ncols_padded)  (lane-dense)
        o_ref[0] = jnp.dot(y, pm_ref[...], preferred_element_type=jnp.float32)
    return kernel


def _lane_tile(PP):
    """Smallest multiple of PP that is lane-aligned (x128) and >= 256."""
    lt = PP
    while lt % 128 != 0 or lt < 256:
        lt += PP
    return lt


def conv_spp_level(x, w1f, b1, w2f, b2, mask, poolmat, P):
    """x: (3, N*P*P) patches concatenated on the lane axis."""
    C, total = x.shape
    PP = P * P
    lt = _lane_tile(PP)
    assert total % lt == 0, "lane tiling must cover whole level"
    G = total // lt
    ncols = poolmat.shape[1]                       # already padded to x128
    shifts = []
    for dy in range(3):
        for dx in range(3):
            off = (dy - 1) * P + (dx - 1)
            shifts.append((-off) % lt)
    return pl.pallas_call(
        make_conv_spp_kernel(tuple(shifts)),
        out_shape=jax.ShapeDtypeStruct((G, OUT_CHANNELS, ncols), jnp.float32),
        grid=(G,),
        in_specs=[
            pl.BlockSpec((C, lt), lambda i: (0, i)),
            pl.BlockSpec((64, 27), lambda i: (0, 0)),
            pl.BlockSpec((64, 1), lambda i: (0, 0)),
            pl.BlockSpec((OUT_CHANNELS, 9 * 64), lambda i: (0, 0)),
            pl.BlockSpec((OUT_CHANNELS, 1), lambda i: (0, 0)),
            pl.BlockSpec((9, lt), lambda i: (0, 0)),
            pl.BlockSpec((lt, ncols), lambda i: (0, 0)),
        ],
        out_specs=pl.BlockSpec((1, OUT_CHANNELS, ncols), lambda i: (i, 0, 0)),
        compiler_params=pltpu.CompilerParams(
            dimension_semantics=("parallel",)),
    )(x, w1f, b1, w2f, b2, mask, poolmat)


# =====================================================================
# Weight-streaming linear kernels
# =====================================================================

def _pick_tn(N, K, itemsize, budget=WEIGHT_TILE_BUDGET):
    """Widest x128 lane tile dividing N whose weight tile fits the budget."""
    best = None
    for tn in range(128, N + 1, 128):
        if N % tn == 0 and K * tn * itemsize <= budget:
            best = tn
    return best


def _linear_kernel(x_ref, w_ref, b_ref, o_ref, *, relu):
    y = jnp.dot(x_ref[...], w_ref[...], preferred_element_type=jnp.float32)
    y = y + b_ref[...]
    if relu:
        y = jnp.maximum(y, 0.0)
    o_ref[...] = y


def pallas_linear(x, w, b, relu=False):
    """y = act(x @ w + b); x:(M,K), w:(K,N) f32/bf16, b:(N,) f32."""
    if x.dtype != w.dtype:
        x = x.astype(w.dtype)          # hoisted: one cast, not one per tile
    M, K = x.shape
    N = w.shape[1]
    tn = _pick_tn(N, K, w.dtype.itemsize)
    if tn is None:                                   # fallback: pad N
        tn = 512
        Np = ((N + tn - 1) // tn) * tn
        w = jnp.pad(w, ((0, 0), (0, Np - N)))
        b = jnp.pad(b, (0, Np - N))
    else:
        Np = N
    out = pl.pallas_call(
        functools.partial(_linear_kernel, relu=relu),
        out_shape=jax.ShapeDtypeStruct((M, Np), jnp.float32),
        grid=(Np // tn,),
        in_specs=[
            pl.BlockSpec((M, K), lambda j: (0, 0)),
            pl.BlockSpec((K, tn), lambda j: (0, j)),
            pl.BlockSpec((1, tn), lambda j: (0, j)),
        ],
        out_specs=pl.BlockSpec((M, tn), lambda j: (0, j)),
        compiler_params=pltpu.CompilerParams(
            dimension_semantics=("parallel",), vmem_limit_bytes=VMEM_LIMIT),
    )(x, w, b.reshape(1, Np))
    return out[:, :N] if Np != N else out


def _linear_add_kernel(x_ref, w_ref, b_ref, r_ref, o_ref):
    y = jnp.dot(x_ref[...], w_ref[...], preferred_element_type=jnp.float32)
    o_ref[...] = y + b_ref[...] + r_ref[...]


def pallas_linear_add(x, w, b, resid):
    """resid + x @ w + b; the N axis is streamed in 'parallel' lane-dense
    (M, tn) tiles so v7x can split the weight stream across both TCs.
    The LayerNorm that follows in the transformer block is fused into the
    *consumer* kernel instead (no resident scratch, no arbitrary semantics)."""
    if x.dtype != w.dtype:
        x = x.astype(w.dtype)
    M, K = x.shape
    N = w.shape[1]
    tn = _pick_tn(N, K, w.dtype.itemsize)
    assert tn is not None and N % tn == 0
    return pl.pallas_call(
        _linear_add_kernel,
        out_shape=jax.ShapeDtypeStruct((M, N), jnp.float32),
        grid=(N // tn,),
        in_specs=[
            pl.BlockSpec((M, K), lambda j: (0, 0)),
            pl.BlockSpec((K, tn), lambda j: (0, j)),
            pl.BlockSpec((1, tn), lambda j: (0, j)),
            pl.BlockSpec((M, tn), lambda j: (0, j)),
        ],
        out_specs=pl.BlockSpec((M, tn), lambda j: (0, j)),
        compiler_params=pltpu.CompilerParams(
            dimension_semantics=("parallel",), vmem_limit_bytes=VMEM_LIMIT),
    )(x, w, b.reshape(1, N), resid)


# =====================================================================
# Fused qkv -> multi-head attention -> head-concat (single launch)
# =====================================================================

def _qkv_attn_kernel(qkv_ref, o_ref, *, B, S, H, DHh, D, scale, rows_pad):
    # keep pad rows finite (they are zero-weighted by the averaging matrix)
    if rows_pad > B * S:
        o_ref[B * S:rows_pad, :] = jnp.zeros((rows_pad - B * S, D),
                                             o_ref.dtype)
    for b in range(B):
        r0 = b * S
        blk = qkv_ref[r0:r0 + S, :]                      # (S, 3*D) f32
        heads = []
        for h in range(H):
            c0 = h * DHh
            q = blk[:, c0:c0 + DHh]
            k = blk[:, D + c0:D + c0 + DHh]
            v = blk[:, 2 * D + c0:2 * D + c0 + DHh]
            s = jax.lax.dot_general(q, k, (((1,), (1,)), ((), ())),
                                    preferred_element_type=jnp.float32) * scale
            s = s - jnp.max(s, axis=-1, keepdims=True)
            e = jnp.exp(s)
            p = e / jnp.sum(e, axis=-1, keepdims=True)   # exact division
            heads.append(jnp.dot(p, v, preferred_element_type=jnp.float32))
        o_ref[r0:r0 + S, :] = jnp.concatenate(heads, axis=-1)


def pallas_qkv_attention(qkv, B, S, H, dh, scale):
    rows_pad, threeD = qkv.shape
    D = threeD // 3
    return pl.pallas_call(
        functools.partial(_qkv_attn_kernel, B=B, S=S, H=H, DHh=dh, D=D,
                          scale=scale, rows_pad=rows_pad),
        out_shape=jax.ShapeDtypeStruct((rows_pad, D), jnp.float32),
        compiler_params=pltpu.CompilerParams(vmem_limit_bytes=VMEM_LIMIT),
    )(qkv)


# =====================================================================
# LN1 fused with ffn1 (outputs x1 and relu(ffn1) in bf16)
# =====================================================================

def _ln_ffn_kernel(xp_ref, g_ref, be_ref, w_ref, b_ref, x1_ref, ff_ref):
    h = xp_ref[...]
    mu = jnp.mean(h, axis=-1, keepdims=True)
    d = h - mu
    var = jnp.mean(d * d, axis=-1, keepdims=True)
    x1 = d * jax.lax.rsqrt(var + 1e-5) * g_ref[...] + be_ref[...]
    x1_ref[...] = x1
    y = jnp.dot(x1.astype(w_ref.dtype), w_ref[...],
                preferred_element_type=jnp.float32) + b_ref[...]
    ff_ref[...] = jnp.maximum(y, 0.0).astype(ff_ref.dtype)


def pallas_ln_ffn(x_pre, gamma, beta, w, b):
    M, D = x_pre.shape
    F = w.shape[1]
    return pl.pallas_call(
        _ln_ffn_kernel,
        out_shape=(jax.ShapeDtypeStruct((M, D), jnp.float32),
                   jax.ShapeDtypeStruct((M, F), jnp.bfloat16)),
        compiler_params=pltpu.CompilerParams(vmem_limit_bytes=VMEM_LIMIT),
    )(x_pre, gamma.reshape(1, D), beta.reshape(1, D), w, b.reshape(1, F))


# =====================================================================
# LN2 fused with token-mean + classifier
# =====================================================================

def _ln_mean_cls_kernel(xp_ref, g_ref, be_ref, avg_ref, w_ref, b_ref, o_ref):
    h = xp_ref[...]
    mu = jnp.mean(h, axis=-1, keepdims=True)
    d = h - mu
    var = jnp.mean(d * d, axis=-1, keepdims=True)
    x2 = d * jax.lax.rsqrt(var + 1e-5) * g_ref[...] + be_ref[...]
    pooled = jnp.dot(avg_ref[...], x2, preferred_element_type=jnp.float32)
    o_ref[...] = jnp.dot(pooled, w_ref[...],
                         preferred_element_type=jnp.float32) + b_ref[...]


def pallas_ln_mean_classifier(x_pre, gamma, beta, avg, wc, bc):
    M, D = x_pre.shape
    B = avg.shape[0]
    NC = wc.shape[1]
    return pl.pallas_call(
        _ln_mean_cls_kernel,
        out_shape=jax.ShapeDtypeStruct((B, NC), jnp.float32),
        compiler_params=pltpu.CompilerParams(vmem_limit_bytes=VMEM_LIMIT),
    )(x_pre, gamma.reshape(1, D), beta.reshape(1, D), avg, wc,
      bc.reshape(1, NC))


# =====================================================================
# Deterministic parameter / constant construction (glue)
# =====================================================================

def build_tap_masks(P, lane_tile):
    """(9, lane_tile) validity masks for the 3x3 taps (conv padding=1)."""
    PP = P * P
    m = np.zeros((9, PP), np.float32)
    for dy in range(3):
        for dx in range(3):
            t = dy * 3 + dx
            for y in range(P):
                for x in range(P):
                    if 0 <= y + dy - 1 < P and 0 <= x + dx - 1 < P:
                        m[t, y * P + x] = 1.0
    return np.tile(m, (1, lane_tile // PP))


def build_pool_mat(P):
    """(PP, 21) columns = [pool1 | pool2 (2x2) | pool4 (4x4)] avg-pool weights."""
    PP = P * P
    cols = []
    for ps in POOL_SIZES:
        k = P // ps
        m = np.zeros((PP, ps * ps), np.float32)
        for py in range(ps):
            for px in range(ps):
                for yy in range(py * k, (py + 1) * k):
                    for xx in range(px * k, (px + 1) * k):
                        m[yy * P + xx, py * ps + px] = 1.0 / (k * k)
        cols.append(m)
    return np.concatenate(cols, axis=1)


def build_pool_block(P, lane_tile):
    """Block-diagonal pooling matrix, columns zero-padded to a x128 multiple."""
    PP = P * P
    npb = lane_tile // PP
    blk = np.kron(np.eye(npb, dtype=np.float32), build_pool_mat(P))
    ncols = blk.shape[1]
    ncols_pad = ((ncols + 127) // 128) * 128
    if ncols_pad != ncols:
        blk = np.concatenate(
            [blk, np.zeros((lane_tile, ncols_pad - ncols), np.float32)],
            axis=1)
    return blk


def build_position_embeddings():
    positions = []
    for l in range(NUM_LEVELS + 1):
        n = 2 ** l
        for y in range(n):
            for x in range(n):
                positions.append((l, y, x))
    pos = np.asarray(positions, np.float32)                   # (21, 3)
    per = EMBED_DIM // 3
    div = np.exp(np.arange(0, per, 2, dtype=np.float32)
                 * -(np.log(10000.0) / per))
    pe = np.zeros((len(positions), EMBED_DIM), np.float32)
    for i in range(3):
        p = pos[:, i:i + 1]
        part = np.zeros((len(positions), per), np.float32)
        part[:, 0::2] = np.sin(p * div)
        part[:, 1::2] = np.cos(p * div)
        pe[:, i * per:(i + 1) * per] = part
    return pe


def init_params(key, image_size):
    ks = jax.random.split(key, 16)
    std = 0.02
    p = {}
    # conv weights restacked as (Cout, 9*Cin): row index = tap*Cin + cin
    w1 = jax.random.normal(ks[0], (64, 3, 3, 3), jnp.float32) * std
    p["w1f"] = jnp.transpose(w1, (0, 2, 3, 1)).reshape(64, 27)
    p["b1"] = (jax.random.normal(ks[1], (64,), jnp.float32) * std).reshape(64, 1)
    w2 = jax.random.normal(ks[2], (OUT_CHANNELS, 64, 3, 3), jnp.float32) * std
    p["w2f"] = jnp.transpose(w2, (0, 2, 3, 1)).reshape(OUT_CHANNELS, 9 * 64)
    p["b2"] = (jax.random.normal(ks[3], (OUT_CHANNELS,), jnp.float32)
               * std).reshape(OUT_CHANNELS, 1)
    # projection of the (input-independent) positional embeddings -> hoisted
    wp = jax.random.normal(ks[4], (EMBED_DIM, D_MODEL), jnp.float32) * std
    bp = jax.random.normal(ks[5], (D_MODEL,), jnp.float32) * std
    pe = jnp.asarray(build_position_embeddings())
    p["pe_proj"] = pallas_linear(pe, wp, bp)                   # (21, 2688)
    # transformer weights stored bf16 (HBM-bandwidth bound linears), biases f32
    p["w_in"] = (jax.random.normal(ks[6], (D_MODEL, 3 * D_MODEL), jnp.float32)
                 * std).astype(jnp.bfloat16)
    p["b_in"] = jax.random.normal(ks[7], (3 * D_MODEL,), jnp.float32) * std
    p["w_o"] = (jax.random.normal(ks[8], (D_MODEL, D_MODEL), jnp.float32)
                * std).astype(jnp.bfloat16)
    p["b_o"] = jax.random.normal(ks[9], (D_MODEL,), jnp.float32) * std
    p["g1"] = jnp.ones((D_MODEL,), jnp.float32)
    p["be1"] = jnp.zeros((D_MODEL,), jnp.float32)
    p["w_f1"] = (jax.random.normal(ks[10], (D_MODEL, DIM_FF), jnp.float32)
                 * std).astype(jnp.bfloat16)
    p["b_f1"] = jax.random.normal(ks[11], (DIM_FF,), jnp.float32) * std
    p["w_f2"] = (jax.random.normal(ks[12], (DIM_FF, D_MODEL), jnp.float32)
                 * std).astype(jnp.bfloat16)
    p["b_f2"] = jax.random.normal(ks[13], (D_MODEL,), jnp.float32) * std
    p["g2"] = jnp.ones((D_MODEL,), jnp.float32)
    p["be2"] = jnp.zeros((D_MODEL,), jnp.float32)
    p["wc"] = jax.random.normal(ks[14], (D_MODEL, NUM_CLASSES), jnp.float32) * std
    p["bc"] = jax.random.normal(ks[15], (NUM_CLASSES,), jnp.float32) * std
    # per-level geometric constants (border masks + block-diag pool matrices)
    for l in range(NUM_LEVELS + 1):
        P = image_size // (2 ** l)
        lt = _lane_tile(P * P)
        p[f"mask_{l}"] = jnp.asarray(build_tap_masks(P, lt))
        p[f"pool_{l}"] = jnp.asarray(build_pool_block(P, lt))
    return p


# =====================================================================
# Forward pass
# =====================================================================

def _pad_rows(x, rows):
    pad = rows - x.shape[0]
    return x if pad == 0 else jnp.pad(x, ((0, pad), (0, 0)))


def forward(params, image):
    B, C, H, W = image.shape
    S, E = NUM_PATCHES, D_MODEL

    # ----- hierarchical patches -> conv+SPP features (Pallas, per level) -----
    spp_levels = []
    for l in range(NUM_LEVELS + 1):
        n = 2 ** l
        P = H // n
        PP = P * P
        N = B * n * n
        # (C, N*PP): patches concatenated on the lane axis, row-major pixels
        x = image.reshape(B, C, n, P, n, P).transpose(1, 0, 2, 4, 3, 5)
        x = x.reshape(C, N * PP)
        out = conv_spp_level(x, params["w1f"], params["b1"], params["w2f"],
                             params["b2"], params[f"mask_{l}"],
                             params[f"pool_{l}"], P)   # (G, 128, ncols_padded)
        lt = _lane_tile(PP)
        G, npb = (N * PP) // lt, lt // PP
        ncols = npb * N_POOL_COLS
        out = out[..., :ncols].reshape(G, OUT_CHANNELS, npb, N_POOL_COLS)
        out = out.transpose(0, 2, 1, 3).reshape(N, OUT_CHANNELS, N_POOL_COLS)
        parts, off = [], 0
        for ps in POOL_SIZES:                                   # PyTorch concat order
            parts.append(out[:, :, off:off + ps * ps]
                         .reshape(N, OUT_CHANNELS * ps * ps))
            off += ps * ps
        spp = jnp.concatenate(parts, axis=1)                    # (N, 2688)
        spp_levels.append(spp.reshape(B, n * n, SPP_LEN))
    spp_all = jnp.concatenate(spp_levels, axis=1)               # (B, 21, 2688)

    # ----- add (pre-projected) positional embeddings -----
    src = spp_all + params["pe_proj"][None, :, :]
    rows = B * S
    rows_p = ((rows + 7) // 8) * 8                              # sublane-aligned
    srcp = _pad_rows(src.reshape(rows, E), rows_p)              # f32 residual
    srcp_bf = srcp.astype(jnp.bfloat16)                         # hoisted cast

    # ----- TransformerEncoderLayer (post-norm, relu, eval-mode) -----
    qkv = pallas_linear(srcp_bf, params["w_in"], params["b_in"])   # (48, 8064)
    attn = pallas_qkv_attention(qkv, B, S, NHEAD, DH,
                                1.0 / math.sqrt(DH))               # (48, 2688)
    x1_pre = pallas_linear_add(attn, params["w_o"], params["b_o"], srcp)
    x1, ff = pallas_ln_ffn(x1_pre, params["g1"], params["be1"],
                           params["w_f1"], params["b_f1"])  # x1 f32, ff bf16
    x2_pre = pallas_linear_add(ff, params["w_f2"], params["b_f2"], x1)

    # ----- LN2 + mean over patches + classifier (fused, single launch) -----
    avg = np.zeros((B, rows_p), np.float32)
    for b in range(B):
        avg[b, b * S:(b + 1) * S] = 1.0 / S
    logits = pallas_ln_mean_classifier(x2_pre, params["g2"], params["be2"],
                                       jnp.asarray(avg),
                                       params["wc"], params["bc"])
    return logits


if __name__ == "__main__":
    key = jax.random.PRNGKey(0)
    k_img, k_par = jax.random.split(key)
    B, C, IMG = 2, 3, 16          # small image_size consistent with the module
    image = jax.random.normal(k_img, (B, C, IMG, IMG), jnp.float32)
    params = init_params(k_par, IMG)
    fwd = jax.jit(forward)
    logits = fwd(params, image)
    jax.block_until_ready(logits)
    assert logits.shape == (B, NUM_CLASSES)
    assert bool(jnp.all(jnp.isfinite(logits)))
    print("KERNEL_OK")
</pallas_src>

<mosaic_0001>
module attributes {stable_mosaic.version = 11 : i64} {
  func.func @_linear_kernel(%arg0: i32, %arg1: memref<21x48xf32, #tpu.memory_space<vmem>>, %arg2: memref<48x2688xf32, #tpu.memory_space<vmem>>, %arg3: memref<1x2688xf32, #tpu.memory_space<vmem>>, %arg4: memref<21x2688xf32, #tpu.memory_space<vmem>>) attributes {dimension_semantics = [#tpu.dimension_semantics<parallel>], iteration_bounds = array<i64: 1>, scalar_prefetch = 0 : i64, scratch_operands = 0 : i64, tpu.core_type = #tpu.core_type<tc>, window_params = [{pipeline_mode = #tpu.pipeline_mode<synchronous>, transform_indices = @transform_0, window_bounds = array<i64: 21, 48>}, {transform_indices = @transform_1, window_bounds = array<i64: 48, 2688>}, {transform_indices = @transform_2, window_bounds = array<i64: 1, 2688>}, {transform_indices = @transform_3, window_bounds = array<i64: 21, 2688>}]} {
    %c0 = arith.constant 0 : index
    %c0_0 = arith.constant 0 : index
    %0 = vector.load %arg1[%c0, %c0_0] : memref<21x48xf32, #tpu.memory_space<vmem>>, vector<21x48xf32>
    %c0_1 = arith.constant 0 : index
    %c0_2 = arith.constant 0 : index
    %1 = vector.load %arg2[%c0_1, %c0_2] : memref<48x2688xf32, #tpu.memory_space<vmem>>, vector<48x2688xf32>
    %cst = arith.constant dense<0.000000e+00> : vector<21x2688xf32>
    %2 = tpu.matmul %0, %1, %cst {dimension_numbers = #tpu.dot_dimension_numbers<[1], [0], [0], [1], [0, 0, 1, 1], [], []>} : vector<21x48xf32>, vector<48x2688xf32>, vector<21x2688xf32> -> vector<21x2688xf32>
    %c0_3 = arith.constant 0 : index
    %c0_4 = arith.constant 0 : index
    %3 = vector.load %arg3[%c0_3, %c0_4] : memref<1x2688xf32, #tpu.memory_space<vmem>>, vector<1x2688xf32>
    %4 = vector.broadcast %3 : vector<1x2688xf32> to vector<21x2688xf32>
    %5 = arith.addf %2, %4 : vector<21x2688xf32>
    %c0_5 = arith.constant 0 : index
    %c0_6 = arith.constant 0 : index
    %6 = vector.load %arg4[%c0_5, %c0_6] : memref<21x2688xf32, #tpu.memory_space<vmem>>, vector<21x2688xf32>
    tpu.vector_store %arg4[%c0_5, %c0_6], %5 {strides = array<i32>} : memref<21x2688xf32, #tpu.memory_space<vmem>>, vector<21x2688xf32>,
    return
  }
  func.func @transform_0(%arg0: i32) -> (i32, i32) {
    %c0_i32 = arith.constant 0 : i32
    %c0_i32_0 = arith.constant 0 : i32
    %c0_i32_1 = arith.constant 0 : i32
    return %c0_i32, %c0_i32_0 : i32, i32
  }
  func.func @transform_1(%arg0: i32) -> (i32, i32) {
    %c0_i32 = arith.constant 0 : i32
    %c0_i32_0 = arith.constant 0 : i32
    return %c0_i32, %arg0 : i32, i32
  }
  func.func @transform_2(%arg0: i32) -> (i32, i32) {
    %c0_i32 = arith.constant 0 : i32
    %c0_i32_0 = arith.constant 0 : i32
    return %c0_i32, %arg0 : i32, i32
  }
  func.func @transform_3(%arg0: i32) -> (i32, i32) {
    %c0_i32 = arith.constant 0 : i32
    %c0_i32_0 = arith.constant 0 : i32
    return %c0_i32, %arg0 : i32, i32
  }
}

</mosaic_0001>

<llo_original>
// kernel: tpu_custom_call.1
$region0: #{tpu_custom_call.1}
  #allocation0 [shape = 'u32[]', space=smem, size = 0x4, offset = 0x4, fixed_abs, tag = 'smem constant byte address 0x4 - core index']
  #allocation1 [shape = 'u32[144,128]{1,0:T(1,128)}', space=vmem, size = 0x12000, scoped, tag = 'internal scratch']
  %s0 = inlined_call_operand.hbm [shape: f32[21,48], index: 0, kind: input, shape index: {}]
  %s1 = inlined_call_operand.hbm [shape: f32[48,2688], index: 1, kind: input, shape index: {}]
  %s2 = inlined_call_operand.hbm [shape: f32[1,2688], index: 2, kind: input, shape index: {}]
  %s3 = inlined_call_operand.hbm [shape: f32[21,2688], index: 3, kind: output, shape index: {}]
  %s4 = sld [smem:[#allocation0]]
  $region34: #{tpu_custom_call.1} parent=0
    _
  %s6 = ssub.s32 1, %s4
  %s7 = scalar_select 0, %s6, %s4
  $region1: #{tpu_custom_call.1} parent=0
    #allocation2 [shape = 'u8[12288]{0}', space=vmem, size = 0x3000, scoped, tag = 'input window, operand 0, single buffered']
    #allocation3 [shape = 's32[1]{0}', space=sflag, size = 0x4, scoped, tag = 'scoped memory for tpu_custom_call.1']
    #allocation4 [shape = 's32[1]{0}', space=sflag, size = 0x4, scoped, tag = 'scoped memory for tpu_custom_call.1']
    #allocation5 [shape = 'u8[516096]{0}', space=vmem, size = 0x7e000, scoped, tag = 'input window, operand 1, single buffered']
    #allocation6 [shape = 's32[1]{0}', space=sflag, size = 0x4, scoped, tag = 'scoped memory for tpu_custom_call.1']
    #allocation7 [shape = 'u8[10752]{0}', space=vmem, size = 0x2c00, scoped, tag = 'input window, operand 2, single buffered']
    #allocation8 [shape = 'u8[258048]{0}', space=vmem, size = 0x3f000, scoped, tag = 'output window, operand 0, single buffered']
    %8 = vsyncpa [#allocation3], 0
    %9 = vsyncpa [#allocation6], 0
    %10 = vsyncpa [#allocation4], 0
    // Predicated region
    $region2: #{tpu_custom_call.1} parent=1 // pred_check
      _
    $region3: #{tpu_custom_call.1} parent=1 // pred_check_branch
      %12 = sbr.rel (0) target = $region5
    $region4: #{tpu_custom_call.1} parent=1 // pred_region
      %s14 = ssub.s32 384, 384
      %15 = vsyncadd [#allocation3], %s14
      %s16 = sshll.u32 [#allocation2], 4
      %s17 = int_to_ptr.vmem [resolvable:$true] %s16
      %22 = dma.hbm_to_vmem [thread:$0]  %s0, 384, %s17, [#allocation3], 128, 128, 8
    $region5: #{tpu_custom_call.1} parent=1 // pred_fallthru
      _
    // Predicated region
    $region6: #{tpu_custom_call.1} parent=1 // pred_check
      _
    $region7: #{tpu_custom_call.1} parent=1 // pred_check_branch
      %24 = sbr.rel (0) target = $region9
    $region8: #{tpu_custom_call.1} parent=1 // pred_region
      %s26 = ssub.s32 16128, 16128
      %27 = vsyncadd [#allocation6], %s26
      %s28 = sshll.u32 [#allocation5], 4
      %s29 = int_to_ptr.vmem [resolvable:$true] %s28
      %34 = dma.hbm_to_vmem [thread:$0]  %s1, 16128, %s29, [#allocation6], 2688, 2688, 168
    $region9: #{tpu_custom_call.1} parent=1 // pred_fallthru
      _
    // Predicated region
    $region10: #{tpu_custom_call.1} parent=1 // pred_check
      _
    $region11: #{tpu_custom_call.1} parent=1 // pred_check_branch
      %36 = sbr.rel (0) target = $region13
    $region12: #{tpu_custom_call.1} parent=1 // pred_region
      %s38 = ssub.s32 336, 336
      %39 = vsyncadd [#allocation6], %s38
      %s41 = sshll.u32 [#allocation7], 4
      %s42 = int_to_ptr.vmem [resolvable:$true] %s41
      %44 = dma.hbm_to_vmem [thread:$0]  %s2, 336, %s42, [#allocation6]
    $region13: #{tpu_custom_call.1} parent=1 // pred_fallthru
      _
    // Predicated region
    $region14: #{tpu_custom_call.1} parent=1 // pred_check
      _
    $region15: #{tpu_custom_call.1} parent=1 // pred_check_branch
      %46 = sbr.rel (0) target = $region17
    $region16: #{tpu_custom_call.1} parent=1 // pred_region
      %47 = dma.done [#allocation3], 384
    $region17: #{tpu_custom_call.1} parent=1 // pred_fallthru
      _
    // Predicated region
    $region18: #{tpu_custom_call.1} parent=1 // pred_check
      _
    $region19: #{tpu_custom_call.1} parent=1 // pred_check_branch
      %49 = sbr.rel (0) target = $region21
    $region20: #{tpu_custom_call.1} parent=1 // pred_region
      %50 = dma.done [#allocation6], 16128
    $region21: #{tpu_custom_call.1} parent=1 // pred_fallthru
      _
    // Predicated region
    $region22: #{tpu_custom_call.1} parent=1 // pred_check
      _
    $region23: #{tpu_custom_call.1} parent=1 // pred_check_branch
      %52 = sbr.rel (0) target = $region25
    $region24: #{tpu_custom_call.1} parent=1 // pred_region
      %53 = dma.done [#allocation6], 336
    $region25: #{tpu_custom_call.1} parent=1 // pred_fallthru
      _
    %v54 = vld [vmem:[#allocation2] sm:$0xff]
    %v55 = vld [vmem:[#allocation2 + $0x8] sm:$0xff]
    %v56 = vld [vmem:[#allocation2 + $0x10] sm:$0x1f]
    %v57 = vld [vmem:[#allocation5] sm:$0xff]
    %v58 = vld [vmem:[#allocation5 + $0x8] sm:$0xff]
    %v59 = vld [vmem:[#allocation5 + $0x10] sm:$0xff]
    %v60 = vld [vmem:[#allocation5 + $0x18] sm:$0xff]
    %v61 = vld [vmem:[#allocation5 + $0x20] sm:$0xff]
    %v62 = vld [vmem:[#allocation5 + $0x28] sm:$0xff]
    %v63 = vld [vmem:[#allocation5 + $0x30] sm:$0xff]
    %v64 = vld [vmem:[#allocation5 + $0x38] sm:$0xff]
    %v65 = vld [vmem:[#allocation5 + $0x40] sm:$0xff]
    %v66 = vld [vmem:[#allocation5 + $0x48] sm:$0xff]
    %v67 = vld [vmem:[#allocation5 + $0x50] sm:$0xff]
    %v68 = vld [vmem:[#allocation5 + $0x58] sm:$0xff]
    %v69 = vld [vmem:[#allocation5 + $0x60] sm:$0xff]
    %v70 = vld [vmem:[#allocation5 + $0x68] sm:$0xff]
    %v71 = vld [vmem:[#allocation5 + $0x70] sm:$0xff]
    %v72 = vld [vmem:[#allocation5 + $0x78] sm:$0xff]
    %v73 = vld [vmem:[#allocation5 + $0x80] sm:$0xff]
    %v74 = vld [vmem:[#allocation5 + $0x88] sm:$0xff]
    %v75 = vld [vmem:[#allocation5 + $0x90] sm:$0xff]
    %v76 = vld [vmem:[#allocation5 + $0x98] sm:$0xff]
    %v77 = vld [vmem:[#allocation5 + $0xa0] sm:$0xff]
    %v78 = vld [vmem:[#allocation5 + $0xa8] sm:$0xff]
    %v79 = vld [vmem:[#allocation5 + $0xb0] sm:$0xff]
    %v80 = vld [vmem:[#allocation5 + $0xb8] sm:$0xff]
    %v81 = vld [vmem:[#allocation5 + $0xc0] sm:$0xff]
    %v82 = vld [vmem:[#allocation5 + $0xc8] sm:$0xff]
    %v83 = vld [vmem:[#allocation5 + $0xd0] sm:$0xff]
    %v84 = vld [vmem:[#allocation5 + $0xd8] sm:$0xff]
    %v85 = vld [vmem:[#allocation5 + $0xe0] sm:$0xff]
    %v86 = vld [vmem:[#allocation5 + $0xe8] sm:$0xff]
    %v87 = vld [vmem:[#allocation5 + $0xf0] sm:$0xff]
    %v88 = vld [vmem:[#allocation5 + $0xf8] sm:$0xff]
    %v89 = vld [vmem:[#allocation5 + $0x100] sm:$0xff]
    %v90 = vld [vmem:[#allocation5 + $0x108] sm:$0xff]
    %v91 = vld [vmem:[#allocation5 + $0x110] sm:$0xff]
    %v92 = vld [vmem:[#allocation5 + $0x118] sm:$0xff]
    %v93 = vld [vmem:[#allocation5 + $0x120] sm:$0xff]
    %v94 = vld [vmem:[#allocation5 + $0x128] sm:$0xff]
    %v95 = vld [vmem:[#allocation5 + $0x130] sm:$0xff]
    %v96 = vld [vmem:[#allocation5 + $0x138] sm:$0xff]
    %v97 = vld [vmem:[#allocation5 + $0x140] sm:$0xff]
    %v98 = vld [vmem:[#allocation5 + $0x148] sm:$0xff]
    %v99 = vld [vmem:[#allocation5 + $0x150] sm:$0xff]
    %v100 = vld [vmem:[#allocation5 + $0x158] sm:$0xff]
    %v101 = vld [vmem:[#allocation5 + $0x160] sm:$0xff]
    %v102 = vld [vmem:[#allocation5 + $0x168] sm:$0xff]
    %v103 = vld [vmem:[#allocation5 + $0x170] sm:$0xff]
    %v104 = vld [vmem:[#allocation5 + $0x178] sm:$0xff]
    %v105 = vld [vmem:[#allocation5 + $0x180] sm:$0xff]
    %v106 = vld [vmem:[#allocation5 + $0x188] sm:$0xff]
    %v107 = vld [vmem:[#allocation5 + $0x190] sm:$0xff]
    %v108 = vld [vmem:[#allocation5 + $0x198] sm:$0xff]
    %v109 = vld [vmem:[#allocation5 + $0x1a0] sm:$0xff]
    %v110 = vld [vmem:[#allocation5 + $0x1a8] sm:$0xff]
    %v111 = vld [vmem:[#allocation5 + $0x1b0] sm:$0xff]
    %v112 = vld [vmem:[#allocation5 + $0x1b8] sm:$0xff]
    %v113 = vld [vmem:[#allocation5 + $0x1c0] sm:$0xff]
    %v114 = vld [vmem:[#allocation5 + $0x1c8] sm:$0xff]
    %v115 = vld [vmem:[#allocation5 + $0x1d0] sm:$0xff]
    %v116 = vld [vmem:[#allocation5 + $0x1d8] sm:$0xff]
    %v117 = vld [vmem:[#allocation5 + $0x1e0] sm:$0xff]
    %v118 = vld [vmem:[#allocation5 + $0x1e8] sm:$0xff]
    %v119 = vld [vmem:[#allocation5 + $0x1f0] sm:$0xff]
    %v120 = vld [vmem:[#allocation5 + $0x1f8] sm:$0xff]
    %v121 = vld [vmem:[#allocation5 + $0x200] sm:$0xff]
    %v122 = vld [vmem:[#allocation5 + $0x208] sm:$0xff]
    %v123 = vld [vmem:[#allocation5 + $0x210] sm:$0xff]
    %v124 = vld [vmem:[#allocation5 + $0x218] sm:$0xff]
    %v125 = vld [vmem:[#allocation5 + $0x220] sm:$0xff]
    %v126 = vld [vmem:[#allocation5 + $0x228] sm:$0xff]
    %v127 = vld [vmem:[#allocation5 + $0x230] sm:$0xff]
    %v128 = vld [vmem:[#allocation5 + $0x238] sm:$0xff]
    %v129 = vld [vmem:[#allocation5 + $0x240] sm:$0xff]
    %v130 = vld [vmem:[#allocation5 + $0x248] sm:$0xff]
    %v131 = vld [vmem:[#allocation5 + $0x250] sm:$0xff]
    %v132 = vld [vmem:[#allocation5 + $0x258] sm:$0xff]
    %v133 = vld [vmem:[#allocation5 + $0x260] sm:$0xff]
    %v134 = vld [vmem:[#allocation5 + $0x268] sm:$0xff]
    %v135 = vld [vmem:[#allocation5 + $0x270] sm:$0xff]
    %v136 = vld [vmem:[#allocation5 + $0x278] sm:$0xff]
    %v137 = vld [vmem:[#allocation5 + $0x280] sm:$0xff]
    %v138 = vld [vmem:[#allocation5 + $0x288] sm:$0xff]
    %v139 = vld [vmem:[#allocation5 + $0x290] sm:$0xff]
    %v140 = vld [vmem:[#allocation5 + $0x298] sm:$0xff]
    %v141 = vld [vmem:[#allocation5 + $0x2a0] sm:$0xff]
    %v142 = vld [vmem:[#allocation5 + $0x2a8] sm:$0xff]
    %v143 = vld [vmem:[#allocation5 + $0x2b0] sm:$0xff]
    %v144 = vld [vmem:[#allocation5 + $0x2b8] sm:$0xff]
    %v145 = vld [vmem:[#allocation5 + $0x2c0] sm:$0xff]
    %v146 = vld [vmem:[#allocation5 + $0x2c8] sm:$0xff]
    %v147 = vld [vmem:[#allocation5 + $0x2d0] sm:$0xff]
    %v148 = vld [vmem:[#allocation5 + $0x2d8] sm:$0xff]
    %v149 = vld [vmem:[#allocation5 + $0x2e0] sm:$0xff]
    %v150 = vld [vmem:[#allocation5 + $0x2e8] sm:$0xff]
    %v151 = vld [vmem:[#allocation5 + $0x2f0] sm:$0xff]
    %v152 = vld [vmem:[#allocation5 + $0x2f8] sm:$0xff]
    %v153 = vld [vmem:[#allocation5 + $0x300] sm:$0xff]
    %v154 = vld [vmem:[#allocation5 + $0x308] sm:$0xff]
    %v155 = vld [vmem:[#allocation5 + $0x310] sm:$0xff]
    %v156 = vld [vmem:[#allocation5 + $0x318] sm:$0xff]
    %v157 = vld [vmem:[#allocation5 + $0x320] sm:$0xff]
    %v158 = vld [vmem:[#allocation5 + $0x328] sm:$0xff]
    %v159 = vld [vmem:[#allocation5 + $0x330] sm:$0xff]
    %v160 = vld [vmem:[#allocation5 + $0x338] sm:$0xff]
    %v161 = vld [vmem:[#allocation5 + $0x340] sm:$0xff]
    %v162 = vld [vmem:[#allocation5 + $0x348] sm:$0xff]
    %v163 = vld [vmem:[#allocation5 + $0x350] sm:$0xff]
    %v164 = vld [vmem:[#allocation5 + $0x358] sm:$0xff]
    %v165 = vld [vmem:[#allocation5 + $0x360] sm:$0xff]
    %v166 = vld [vmem:[#allocation5 + $0x368] sm:$0xff]
    %v167 = vld [vmem:[#allocation5 + $0x370] sm:$0xff]
    %v168 = vld [vmem:[#allocation5 + $0x378] sm:$0xff]
    %v169 = vld [vmem:[#allocation5 + $0x380] sm:$0xff]
    %v170 = vld [vmem:[#allocation5 + $0x388] sm:$0xff]
    %v171 = vld [vmem:[#allocation5 + $0x390] sm:$0xff]
    %v172 = vld [vmem:[#allocation5 + $0x398] sm:$0xff]
    %v173 = vld [vmem:[#allocation5 + $0x3a0] sm:$0xff]
    %v174 = vld [vmem:[#allocation5 + $0x3a8] sm:$0xff]
    %v175 = vld [vmem:[#allocation5 + $0x3b0] sm:$0xff]
    %v176 = vld [vmem:[#allocation5 + $0x3b8] sm:$0xff]
    %v177 = vld [vmem:[#allocation5 + $0x3c0] sm:$0xff]
    %v178 = vld [vmem:[#allocation5 + $0x3c8] sm:$0xff]
    %v179 = vld [vmem:[#allocation5 + $0x3d0] sm:$0xff]
    %v180 = vld [vmem:[#allocation5 + $0x3d8] sm:$0xff]
    %v181 = vld [vmem:[#allocation5 + $0x3e0] sm:$0xff]
    %v182 = vld [vmem:[#allocation5 + $0x3e8] sm:$0xff]
    %v183 = vld [vmem:[#allocation7] sm:$0xff]
    %v184 = vld [vmem:[#allocation7 + $0x8] sm:$0xff]
    %v185 = vld [vmem:[#allocation7 + $0x10] sm:$0x1f]
    %v189 = vlaneseq
    %v190 = vshrl.u32 %v189, 7
    %v191 = vsub.s32 0, %v190
    %v192 = vrot.slane %v183, %v191
    %v193 = vlaneseq
    %v194 = vshrl.u32 %v193, 7
    %v195 = vsub.s32 1, %v194
    %v196 = vrot.slane %v183, %v195
    %v197 = vlaneseq
    %v198 = vshrl.u32 %v197, 7
    %v199 = vsub.s32 2, %v198
    %v200 = vrot.slane %v183, %v199
    %v201 = vlaneseq
    %v202 = vshrl.u32 %v201, 7
    %v203 = vsub.s32 3, %v202
    %v204 = vrot.slane %v183, %v203
    %v205 = vlaneseq
    %v206 = vshrl.u32 %v205, 7
    %v207 = vsub.s32 4, %v206
    %v208 = vrot.slane %v183, %v207
    %v209 = vlaneseq
    %v210 = vshrl.u32 %v209, 7
    %v211 = vsub.s32 5, %v210
    %v212 = vrot.slane %v183, %v211
    %v213 = vlaneseq
    %v214 = vshrl.u32 %v213, 7
    %v215 = vsub.s32 6, %v214
    %v216 = vrot.slane %v183, %v215
    %v217 = vlaneseq
    %v218 = vshrl.u32 %v217, 7
    %v219 = vsub.s32 7, %v218
    %v220 = vrot.slane %v183, %v219
    %v221 = vlaneseq
    %v222 = vshrl.u32 %v221, 7
    %v223 = vsub.s32 0, %v222
    %v224 = vrot.slane %v184, %v223
    %v225 = vlaneseq
    %v226 = vshrl.u32 %v225, 7
    %v227 = vsub.s32 1, %v226
    %v228 = vrot.slane %v184, %v227
    %v229 = vlaneseq
    %v230 = vshrl.u32 %v229, 7
    %v231 = vsub.s32 2, %v230
    %v232 = vrot.slane %v184, %v231
    %v233 = vlaneseq
    %v234 = vshrl.u32 %v233, 7
    %v235 = vsub.s32 3, %v234
    %v236 = vrot.slane %v184, %v235
    %v237 = vlaneseq
    %v238 = vshrl.u32 %v237, 7
    %v239 = vsub.s32 4, %v238
    %v240 = vrot.slane %v184, %v239
    %v241 = vlaneseq
    %v242 = vshrl.u32 %v241, 7
    %v243 = vsub.s32 5, %v242
    %v244 = vrot.slane %v184, %v243
    %v245 = vlaneseq
    %v246 = vshrl.u32 %v245, 7
    %v247 = vsub.s32 6, %v246
    %v248 = vrot.slane %v184, %v247
    %v249 = vlaneseq
    %v250 = vshrl.u32 %v249, 7
    %v251 = vsub.s32 7, %v250
    %v252 = vrot.slane %v184, %v251
    %v253 = vlaneseq
    %v254 = vshrl.u32 %v253, 7
    %v255 = vsub.s32 0, %v254
    %v256 = vrot.slane %v185, %v255
    %v257 = vlaneseq
    %v258 = vshrl.u32 %v257, 7
    %v259 = vsub.s32 1, %v258
    %v260 = vrot.slane %v185, %v259
    %v261 = vlaneseq
    %v262 = vshrl.u32 %v261, 7
    %v263 = vsub.s32 2, %v262
    %v264 = vrot.slane %v185, %v263
    %v265 = vlaneseq
    %v266 = vshrl.u32 %v265, 7
    %v267 = vsub.s32 3, %v266
    %v268 = vrot.slane %v185, %v267
    %v269 = vlaneseq
    %v270 = vshrl.u32 %v269, 7
    %v271 = vsub.s32 4, %v270
    %v272 = vrot.slane %v185, %v271
    %vm294 = vcmask 392192
    %v296 = vsel %vm294, %v54, 0
    %v299 = vsel %vm294, %v55, 0
    %v302 = vsel %vm294, %v56, 0
    %304 = vmatprep.subr.mxu0 %v58
    %305 = vmatpush1.msra.mxu0 %v57
    %306 = vmatprep.subr.mxu0 %v79
    %307 = vmatpush1.msra.mxu0 %v78
    %308 = vmatprep.subr.mxu0 %v100
    %309 = vmatpush1.msra.mxu0 %v99
    %310 = vmatprep.subr.mxu0 %v121
    %311 = vmatpush1.msra.mxu0 %v120
    %312 = vmatprep.subr.mxu0 %v142
    %313 = vmatpush1.msra.mxu0 %v141
    %314 = vmatprep.subr.mxu0 %v163
    %315 = vmatpush1.msra.mxu0 %v162
    %316 = vmatprep.subr.mxu0 0.0
    %317 = vmatpush1.msra.mxu0 0.0
    %318 = vmatprep.subr.mxu0 0.0
    %319 = vmatpush1.msra.mxu0 0.0
    %320 = vmatprep.subr.mxu0 0.0
    %321 = vmatpush1.msra.mxu0 0.0
    %322 = vmatprep.subr.mxu0 0.0
    %323 = vmatpush1.msra.mxu0 0.0
    %324 = vmatprep.subr.mxu0 0.0
    %325 = vmatpush1.msra.mxu0 0.0
    %326 = vmatprep.subr.mxu0 0.0
    %327 = vmatpush1.msra.mxu0 0.0
    %328 = vmatprep.subr.mxu0 0.0
    %329 = vmatpush1.msra.mxu0 0.0
    %330 = vmatprep.subr.mxu0 0.0
    %331 = vmatpush1.msra.mxu0 0.0
    %332 = vmatprep.subr.mxu0 0.0
    %333 = vmatpush1.msra.mxu0 0.0
    %334 = vmatprep.subr.mxu0 0.0
    %335 = vmatpush1.msra.mxu0 0.0
    %336 = vmatprep.subr.mxu0 0.0
    %337 = vmatpush1.msra.mxu0 0.0
    %338 = vmatprep.subr.mxu0 0.0
    %339 = vmatpush1.msra.mxu0 0.0
    %340 = vmatprep.subr.mxu0 0.0
    %341 = vmatpush1.msra.mxu0 0.0
    %342 = vmatprep.subr.mxu0 0.0
    %343 = vmatpush1.msra.mxu0 0.0
    %344 = vmatprep.subr.mxu0 0.0
    %345 = vmatpush1.msra.mxu0 0.0
    %346 = vmatprep.subr.mxu0 0.0
    %347 = vmatpush1.msra.mxu0 0.0
    %348 = vmatprep.subr.mxu0 0.0
    %349 = vmatpush1.msra.mxu0 0.0
    %350 = vmatprep.subr.mxu0 0.0
    %351 = vmatpush1.msra.mxu0 0.0
    %352 = vmatprep.subr.mxu0 0.0
    %353 = vmatpush1.msra.mxu0 0.0
    %354 = vmatprep.subr.mxu0 0.0
    %355 = vmatpush1.msra.mxu0 0.0
    %356 = vmatprep.subr.mxu0 0.0
    %357 = vmatpush1.msra.mxu0 0.0
    %358 = vmatprep.subr.mxu0 0.0
    %359 = vmatpush1.msra.mxu0 0.0
    %360 = vmatprep.subr.mxu0 0.0
    %361 = vmatpush1.msra.mxu0 0.0
    %362 = vmatprep.subr.mxu0 0.0
    %363 = vmatpush1.msra.mxu0 0.0
    %364 = vmatprep.subr.mxu0 0.0
    %365 = vmatpush1.msra.mxu0 0.0
    %366 = vmatprep.subr.mxu0 0.0
    %367 = vmatpush1.msra.mxu0 0.0
    %368 = vmatprep.mubr.f32.mxu0 0.0
    %369 = vmatmul.mubr.f32.gmra.mrb[0].mxu0 %v296
    %v370 = vpop.f32.mrb[0].mxu0
    %v371 = vadd.f32 %v192, %v370
    %v372 = vpop.f32.mrb[0].mxu0
    %v373 = vadd.f32 %v196, %v372
    %374 = vmatprep.mubr.f32.mxu0 0.0
    %375 = vmatmul.mubr.f32.gmra.mrb[0].mxu0 %v299
    %v376 = vpop.f32.mrb[0].mxu0
    %v377 = vadd.f32 %v192, %v376
    %v378 = vpop.f32.mrb[0].mxu0
    %v379 = vadd.f32 %v196, %v378
    %380 = vmatprep.mubr.f32.mxu0 0.0
    %381 = vmatmul.mubr.f32.gmra.mrb[0].mxu0 %v302
    %v382 = vpop.f32.mrb[0].mxu0
    %v383 = vadd.f32 %v192, %v382
    %v384 = vpop.f32.mrb[0].mxu0
    %v385 = vadd.f32 %v196, %v384
    %386 = vdwg.mxu0
    %387 = vmatprep.subr.mxu0 %v60
    %388 = vmatpush1.msra.mxu0 %v59
    %389 = vmatprep.subr.mxu0 %v81
    %390 = vmatpush1.msra.mxu0 %v80
    %391 = vmatprep.subr.mxu0 %v102
    %392 = vmatpush1.msra.mxu0 %v101
    %393 = vmatprep.subr.mxu0 %v123
    %394 = vmatpush1.msra.mxu0 %v122
    %395 = vmatprep.subr.mxu0 %v144
    %396 = vmatpush1.msra.mxu0 %v143
    %397 = vmatprep.subr.mxu0 %v165
    %398 = vmatpush1.msra.mxu0 %v164
    %399 = vmatprep.subr.mxu0 0.0
    %400 = vmatpush1.msra.mxu0 0.0
    %401 = vmatprep.subr.mxu0 0.0
    %402 = vmatpush1.msra.mxu0 0.0
    %403 = vmatprep.subr.mxu0 0.0
    %404 = vmatpush1.msra.mxu0 0.0
    %405 = vmatprep.subr.mxu0 0.0
    %406 = vmatpush1.msra.mxu0 0.0
    %407 = vmatprep.subr.mxu0 0.0
    %408 = vmatpush1.msra.mxu0 0.0
    %409 = vmatprep.subr.mxu0 0.0
    %410 = vmatpush1.msra.mxu0 0.0
    %411 = vmatprep.subr.mxu0 0.0
    %412 = vmatpush1.msra.mxu0 0.0
    %413 = vmatprep.subr.mxu0 0.0
    %414 = vmatpush1.msra.mxu0 0.0
    %415 = vmatprep.subr.mxu0 0.0
    %416 = vmatpush1.msra.mxu0 0.0
    %417 = vmatprep.subr.mxu0 0.0
    %418 = vmatpush1.msra.mxu0 0.0
    %419 = vmatprep.subr.mxu0 0.0
    %420 = vmatpush1.msra.mxu0 0.0
    %421 = vmatprep.subr.mxu0 0.0
    %422 = vmatpush1.msra.mxu0 0.0
    %423 = vmatprep.subr.mxu0 0.0
    %424 = vmatpush1.msra.mxu0 0.0
    %425 = vmatprep.subr.mxu0 0.0
    %426 = vmatpush1.msra.mxu0 0.0
    %427 = vmatprep.subr.mxu0 0.0
    %428 = vmatpush1.msra.mxu0 0.0
    %429 = vmatprep.subr.mxu0 0.0
    %430 = vmatpush1.msra.mxu0 0.0
    %431 = vmatprep.subr.mxu0 0.0
    %432 = vmatpush1.msra.mxu0 0.0
    %433 = vmatprep.subr.mxu0 0.0
    %434 = vmatpush1.msra.mxu0 0.0
    %435 = vmatprep.subr.mxu0 0.0
    %436 = vmatpush1.msra.mxu0 0.0
    %437 = vmatprep.subr.mxu0 0.0
    %438 = vmatpush1.msra.mxu0 0.0
    %439 = vmatprep.subr.mxu0 0.0
    %440 = vmatpush1.msra.mxu0 0.0
    %441 = vmatprep.subr.mxu0 0.0
    %442 = vmatpush1.msra.mxu0 0.0
    %443 = vmatprep.subr.mxu0 0.0
    %444 = vmatpush1.msra.mxu0 0.0
    %445 = vmatprep.subr.mxu0 0.0
    %446 = vmatpush1.msra.mxu0 0.0
    %447 = vmatprep.subr.mxu0 0.0
    %448 = vmatpush1.msra.mxu0 0.0
    %449 = vmatprep.subr.mxu0 0.0
    %450 = vmatpush1.msra.mxu0 0.0
    %451 = vmatprep.mubr.f32.mxu0 0.0
    %452 = vmatmul.mubr.f32.gmra.mrb[0].mxu0 %v296
    %v453 = vpop.f32.mrb[0].mxu0
    %v454 = vadd.f32 %v200, %v453
    %v455 = vpop.f32.mrb[0].mxu0
    %v456 = vadd.f32 %v204, %v455
    %457 = vmatprep.mubr.f32.mxu0 0.0
    %458 = vmatmul.mubr.f32.gmra.mrb[0].mxu0 %v299
    %v459 = vpop.f32.mrb[0].mxu0
    %v460 = vadd.f32 %v200, %v459
    %v461 = vpop.f32.mrb[0].mxu0
    %v462 = vadd.f32 %v204, %v461
    %463 = vmatprep.mubr.f32.mxu0 0.0
    %464 = vmatmul.mubr.f32.gmra.mrb[0].mxu0 %v302
    %v465 = vpop.f32.mrb[0].mxu0
    %v466 = vadd.f32 %v200, %v465
    %v467 = vpop.f32.mrb[0].mxu0
    %v468 = vadd.f32 %v204, %v467
    %469 = vdwg.mxu0
    %470 = vmatprep.subr.mxu0 %v62
    %471 = vmatpush1.msra.mxu0 %v61
    %472 = vmatprep.subr.mxu0 %v83
    %473 = vmatpush1.msra.mxu0 %v82
    %474 = vmatprep.subr.mxu0 %v104
    %475 = vmatpush1.msra.mxu0 %v103
    %476 = vmatprep.subr.mxu0 %v125
    %477 = vmatpush1.msra.mxu0 %v124
    %478 = vmatprep.subr.mxu0 %v146
    %479 = vmatpush1.msra.mxu0 %v145
    %480 = vmatprep.subr.mxu0 %v167
    %481 = vmatpush1.msra.mxu0 %v166
    %482 = vmatprep.subr.mxu0 0.0
    %483 = vmatpush1.msra.mxu0 0.0
    %484 = vmatprep.subr.mxu0 0.0
    %485 = vmatpush1.msra.mxu0 0.0
    %486 = vmatprep.subr.mxu0 0.0
    %487 = vmatpush1.msra.mxu0 0.0
    %488 = vmatprep.subr.mxu0 0.0
    %489 = vmatpush1.msra.mxu0 0.0
    %490 = vmatprep.subr.mxu0 0.0
    %491 = vmatpush1.msra.mxu0 0.0
    %492 = vmatprep.subr.mxu0 0.0
    %493 = vmatpush1.msra.mxu0 0.0
    %494 = vmatprep.subr.mxu0 0.0
    %495 = vmatpush1.msra.mxu0 0.0
    %496 = vmatprep.subr.mxu0 0.0
    %497 = vmatpush1.msra.mxu0 0.0
    %498 = vmatprep.subr.mxu0 0.0
    %499 = vmatpush1.msra.mxu0 0.0
    %500 = vmatprep.subr.mxu0 0.0
    %501 = vmatpush1.msra.mxu0 0.0
    %502 = vmatprep.subr.mxu0 0.0
    %503 = vmatpush1.msra.mxu0 0.0
    %504 = vmatprep.subr.mxu0 0.0
    %505 = vmatpush1.msra.mxu0 0.0
    %506 = vmatprep.subr.mxu0 0.0
    %507 = vmatpush1.msra.mxu0 0.0
    %508 = vmatprep.subr.mxu0 0.0
    %509 = vmatpush1.msra.mxu0 0.0
    %510 = vmatprep.subr.mxu0 0.0
    %511 = vmatpush1.msra.mxu0 0.0
    %512 = vmatprep.subr.mxu0 0.0
    %513 = vmatpush1.msra.mxu0 0.0
    %514 = vmatprep.subr.mxu0 0.0
    %515 = vmatpush1.msra.mxu0 0.0
    %516 = vmatprep.subr.mxu0 0.0
    %517 = vmatpush1.msra.mxu0 0.0
    %518 = vmatprep.subr.mxu0 0.0
    %519 = vmatpush1.msra.mxu0 0.0
    %520 = vmatprep.subr.mxu0 0.0
    %521 = vmatpush1.msra.mxu0 0.0
    %522 = vmatprep.subr.mxu0 0.0
    %523 = vmatpush1.msra.mxu0 0.0
    %524 = vmatprep.subr.mxu0 0.0
    %525 = vmatpush1.msra.mxu0 0.0
    %526 = vmatprep.subr.mxu0 0.0
    %527 = vmatpush1.msra.mxu0 0.0
    %528 = vmatprep.subr.mxu0 0.0
    %529 = vmatpush1.msra.mxu0 0.0
    %530 = vmatprep.subr.mxu0 0.0
    %531 = vmatpush1.msra.mxu0 0.0
    %532 = vmatprep.subr.mxu0 0.0
    %533 = vmatpush1.msra.mxu0 0.0
    %534 = vmatprep.mubr.f32.mxu0 0.0
    %535 = vmatmul.mubr.f32.gmra.mrb[0].mxu0 %v296
    %v536 = vpop.f32.mrb[0].mxu0
    %v537 = vadd.f32 %v208, %v536
    %v538 = vpop.f32.mrb[0].mxu0
    %v539 = vadd.f32 %v212, %v538
    %540 = vmatprep.mubr.f32.mxu0 0.0
    %541 = vmatmul.mubr.f32.gmra.mrb[0].mxu0 %v299
    %v542 = vpop.f32.mrb[0].mxu0
    %v543 = vadd.f32 %v208, %v542
    %v544 = vpop.f32.mrb[0].mxu0
    %v545 = vadd.f32 %v212, %v544
    %546 = vmatprep.mubr.f32.mxu0 0.0
    %547 = vmatmul.mubr.f32.gmra.mrb[0].mxu0 %v302
    %v548 = vpop.f32.mrb[0].mxu0
    %v549 = vadd.f32 %v208, %v548
    %v550 = vpop.f32.mrb[0].mxu0
    %v551 = vadd.f32 %v212, %v550
    %552 = vdwg.mxu0
    %553 = vmatprep.subr.mxu0 %v64
    %554 = vmatpush1.msra.mxu0 %v63
    %555 = vmatprep.subr.mxu0 %v85
    %556 = vmatpush1.msra.mxu0 %v84
    %557 = vmatprep.subr.mxu0 %v106
    %558 = vmatpush1.msra.mxu0 %v105
    %559 = vmatprep.subr.mxu0 %v127
    %560 = vmatpush1.msra.mxu0 %v126
    %561 = vmatprep.subr.mxu0 %v148
    %562 = vmatpush1.msra.mxu0 %v147
    %563 = vmatprep.subr.mxu0 %v169
    %564 = vmatpush1.msra.mxu0 %v168
    %565 = vmatprep.subr.mxu0 0.0
    %566 = vmatpush1.msra.mxu0 0.0
    %567 = vmatprep.subr.mxu0 0.0
    %568 = vmatpush1.msra.mxu0 0.0
    %569 = vmatprep.subr.mxu0 0.0
    %570 = vmatpush1.msra.mxu0 0.0
    %571 = vmatprep.subr.mxu0 0.0
    %572 = vmatpush1.msra.mxu0 0.0
    %573 = vmatprep.subr.mxu0 0.0
    %574 = vmatpush1.msra.mxu0 0.0
    %575 = vmatprep.subr.mxu0 0.0
    %576 = vmatpush1.msra.mxu0 0.0
    %577 = vmatprep.subr.mxu0 0.0
    %578 = vmatpush1.msra.mxu0 0.0
    %579 = vmatprep.subr.mxu0 0.0
    %580 = vmatpush1.msra.mxu0 0.0
    %581 = vmatprep.subr.mxu0 0.0
    %582 = vmatpush1.msra.mxu0 0.0
    %583 = vmatprep.subr.mxu0 0.0
    %584 = vmatpush1.msra.mxu0 0.0
    %585 = vmatprep.subr.mxu0 0.0
    %586 = vmatpush1.msra.mxu0 0.0
    %587 = vmatprep.subr.mxu0 0.0
    %588 = vmatpush1.msra.mxu0 0.0
    %589 = vmatprep.subr.mxu0 0.0
    %590 = vmatpush1.msra.mxu0 0.0
    %591 = vmatprep.subr.mxu0 0.0
    %592 = vmatpush1.msra.mxu0 0.0
    %593 = vmatprep.subr.mxu0 0.0
    %594 = vmatpush1.msra.mxu0 0.0
    %595 = vmatprep.subr.mxu0 0.0
    %596 = vmatpush1.msra.mxu0 0.0
    %597 = vmatprep.subr.mxu0 0.0
    %598 = vmatpush1.msra.mxu0 0.0
    %599 = vmatprep.subr.mxu0 0.0
    %600 = vmatpush1.msra.mxu0 0.0
    %601 = vmatprep.subr.mxu0 0.0
    %602 = vmatpush1.msra.mxu0 0.0
    %603 = vmatprep.subr.mxu0 0.0
    %604 = vmatpush1.msra.mxu0 0.0
    %605 = vmatprep.subr.mxu0 0.0
    %606 = vmatpush1.msra.mxu0 0.0
    %607 = vmatprep.subr.mxu0 0.0
    %608 = vmatpush1.msra.mxu0 0.0
    %609 = vmatprep.subr.mxu0 0.0
    %610 = vmatpush1.msra.mxu0 0.0
    %611 = vmatprep.subr.mxu0 0.0
    %612 = vmatpush1.msra.mxu0 0.0
    %613 = vmatprep.subr.mxu0 0.0
    %614 = vmatpush1.msra.mxu0 0.0
    %615 = vmatprep.subr.mxu0 0.0
    %616 = vmatpush1.msra.mxu0 0.0
    %617 = vmatprep.mubr.f32.mxu0 0.0
    %618 = vmatmul.mubr.f32.gmra.mrb[0].mxu0 %v296
    %v619 = vpop.f32.mrb[0].mxu0
    %v620 = vadd.f32 %v216, %v619
    %v621 = vpop.f32.mrb[0].mxu0
    %v622 = vadd.f32 %v220, %v621
    %623 = vmatprep.mubr.f32.mxu0 0.0
    %624 = vmatmul.mubr.f32.gmra.mrb[0].mxu0 %v299
    %v625 = vpop.f32.mrb[0].mxu0
    %v626 = vadd.f32 %v216, %v625
    %v627 = vpop.f32.mrb[0].mxu0
    %v628 = vadd.f32 %v220, %v627
    %629 = vmatprep.mubr.f32.mxu0 0.0
    %630 = vmatmul.mubr.f32.gmra.mrb[0].mxu0 %v302
    %v631 = vpop.f32.mrb[0].mxu0
    %v632 = vadd.f32 %v216, %v631
    %v633 = vpop.f32.mrb[0].mxu0
    %v634 = vadd.f32 %v220, %v633
    %635 = vdwg.mxu0
    %636 = vmatprep.subr.mxu0 %v66
    %637 = vmatpush1.msra.mxu0 %v65
    %638 = vmatprep.subr.mxu0 %v87
    %639 = vmatpush1.msra.mxu0 %v86
    %640 = vmatprep.subr.mxu0 %v108
    %641 = vmatpush1.msra.mxu0 %v107
    %642 = vmatprep.subr.mxu0 %v129
    %643 = vmatpush1.msra.mxu0 %v128
    %644 = vmatprep.subr.mxu0 %v150
    %645 = vmatpush1.msra.mxu0 %v149
    %646 = vmatprep.subr.mxu0 %v171
    %647 = vmatpush1.msra.mxu0 %v170
    %648 = vmatprep.subr.mxu0 0.0
    %649 = vmatpush1.msra.mxu0 0.0
    %650 = vmatprep.subr.mxu0 0.0
    %651 = vmatpush1.msra.mxu0 0.0
    %652 = vmatprep.subr.mxu0 0.0
    %653 = vmatpush1.msra.mxu0 0.0
    %654 = vmatprep.subr.mxu0 0.0
    %655 = vmatpush1.msra.mxu0 0.0
    %656 = vmatprep.subr.mxu0 0.0
    %657 = vmatpush1.msra.mxu0 0.0
    %658 = vmatprep.subr.mxu0 0.0
    %659 = vmatpush1.msra.mxu0 0.0
    %660 = vmatprep.subr.mxu0 0.0
    %661 = vmatpush1.msra.mxu0 0.0
    %662 = vmatprep.subr.mxu0 0.0
    %663 = vmatpush1.msra.mxu0 0.0
    %664 = vmatprep.subr.mxu0 0.0
    %665 = vmatpush1.msra.mxu0 0.0
    %666 = vmatprep.subr.mxu0 0.0
    %667 = vmatpush1.msra.mxu0 0.0
    %668 = vmatprep.subr.mxu0 0.0
    %669 = vmatpush1.msra.mxu0 0.0
    %670 = vmatprep.subr.mxu0 0.0
    %671 = vmatpush1.msra.mxu0 0.0
    %672 = vmatprep.subr.mxu0 0.0
    %673 = vmatpush1.msra.mxu0 0.0
    %674 = vmatprep.subr.mxu0 0.0
    %675 = vmatpush1.msra.mxu0 0.0
    %676 = vmatprep.subr.mxu0 0.0
    %677 = vmatpush1.msra.mxu0 0.0
    %678 = vmatprep.subr.mxu0 0.0
    %679 = vmatpush1.msra.mxu0 0.0
    %680 = vmatprep.subr.mxu0 0.0
    %681 = vmatpush1.msra.mxu0 0.0
    %682 = vmatprep.subr.mxu0 0.0
    %683 = vmatpush1.msra.mxu0 0.0
    %684 = vmatprep.subr.mxu0 0.0
    %685 = vmatpush1.msra.mxu0 0.0
    %686 = vmatprep.subr.mxu0 0.0
    %687 = vmatpush1.msra.mxu0 0.0
    %688 = vmatprep.subr.mxu0 0.0
    %689 = vmatpush1.msra.mxu0 0.0
    %690 = vmatprep.subr.mxu0 0.0
    %691 = vmatpush1.msra.mxu0 0.0
    %692 = vmatprep.subr.mxu0 0.0
    %693 = vmatpush1.msra.mxu0 0.0
    %694 = vmatprep.subr.mxu0 0.0
    %695 = vmatpush1.msra.mxu0 0.0
    %696 = vmatprep.subr.mxu0 0.0
    %697 = vmatpush1.msra.mxu0 0.0
    %698 = vmatprep.subr.mxu0 0.0
    %699 = vmatpush1.msra.mxu0 0.0
    %700 = vmatprep.mubr.f32.mxu0 0.0
    %701 = vmatmul.mubr.f32.gmra.mrb[0].mxu0 %v296
    %v702 = vpop.f32.mrb[0].mxu0
    %v703 = vadd.f32 %v224, %v702
    %v704 = vpop.f32.mrb[0].mxu0
    %v705 = vadd.f32 %v228, %v704
    %706 = vmatprep.mubr.f32.mxu0 0.0
    %707 = vmatmul.mubr.f32.gmra.mrb[0].mxu0 %v299
    %v708 = vpop.f32.mrb[0].mxu0
    %v709 = vadd.f32 %v224, %v708
    %v710 = vpop.f32.mrb[0].mxu0
    %v711 = vadd.f32 %v228, %v710
    %712 = vmatprep.mubr.f32.mxu0 0.0
    %713 = vmatmul.mubr.f32.gmra.mrb[0].mxu0 %v302
    %v714 = vpop.f32.mrb[0].mxu0
    %v715 = vadd.f32 %v224, %v714
    %v716 = vpop.f32.mrb[0].mxu0
    %v717 = vadd.f32 %v228, %v716
    %718 = vdwg.mxu0
    %719 = vmatprep.subr.mxu0 %v68
    %720 = vmatpush1.msra.mxu0 %v67
    %721 = vmatprep.subr.mxu0 %v89
    %722 = vmatpush1.msra.mxu0 %v88
    %723 = vmatprep.subr.mxu0 %v110
    %724 = vmatpush1.msra.mxu0 %v109
    %725 = vmatprep.subr.mxu0 %v131
    %726 = vmatpush1.msra.mxu0 %v130
    %727 = vmatprep.subr.mxu0 %v152
    %728 = vmatpush1.msra.mxu0 %v151
    %729 = vmatprep.subr.mxu0 %v173
    %730 = vmatpush1.msra.mxu0 %v172
    %731 = vmatprep.subr.mxu0 0.0
    %732 = vmatpush1.msra.mxu0 0.0
    %733 = vmatprep.subr.mxu0 0.0
    %734 = vmatpush1.msra.mxu0 0.0
    %735 = vmatprep.subr.mxu0 0.0
    %736 = vmatpush1.msra.mxu0 0.0
    %737 = vmatprep.subr.mxu0 0.0
    %738 = vmatpush1.msra.mxu0 0.0
    %739 = vmatprep.subr.mxu0 0.0
    %740 = vmatpush1.msra.mxu0 0.0
    %741 = vmatprep.subr.mxu0 0.0
    %742 = vmatpush1.msra.mxu0 0.0
    %743 = vmatprep.subr.mxu0 0.0
    %744 = vmatpush1.msra.mxu0 0.0
    %745 = vmatprep.subr.mxu0 0.0
    %746 = vmatpush1.msra.mxu0 0.0
    %747 = vmatprep.subr.mxu0 0.0
    %748 = vmatpush1.msra.mxu0 0.0
    %749 = vmatprep.subr.mxu0 0.0
    %750 = vmatpush1.msra.mxu0 0.0
    %751 = vmatprep.subr.mxu0 0.0
    %752 = vmatpush1.msra.mxu0 0.0
    %753 = vmatprep.subr.mxu0 0.0
    %754 = vmatpush1.msra.mxu0 0.0
    %755 = vmatprep.subr.mxu0 0.0
    %756 = vmatpush1.msra.mxu0 0.0
    %757 = vmatprep.subr.mxu0 0.0
    %758 = vmatpush1.msra.mxu0 0.0
    %759 = vmatprep.subr.mxu0 0.0
    %760 = vmatpush1.msra.mxu0 0.0
    %761 = vmatprep.subr.mxu0 0.0
    %762 = vmatpush1.msra.mxu0 0.0
    %763 = vmatprep.subr.mxu0 0.0
    %764 = vmatpush1.msra.mxu0 0.0
    %765 = vmatprep.subr.mxu0 0.0
    %766 = vmatpush1.msra.mxu0 0.0
    %767 = vmatprep.subr.mxu0 0.0
    %768 = vmatpush1.msra.mxu0 0.0
    %769 = vmatprep.subr.mxu0 0.0
    %770 = vmatpush1.msra.mxu0 0.0
    %771 = vmatprep.subr.mxu0 0.0
    %772 = vmatpush1.msra.mxu0 0.0
    %773 = vmatprep.subr.mxu0 0.0
    %774 = vmatpush1.msra.mxu0 0.0
    %775 = vmatprep.subr.mxu0 0.0
    %776 = vmatpush1.msra.mxu0 0.0
    %777 = vmatprep.subr.mxu0 0.0
    %778 = vmatpush1.msra.mxu0 0.0
    %779 = vmatprep.subr.mxu0 0.0
    %780 = vmatpush1.msra.mxu0 0.0
    %781 = vmatprep.subr.mxu0 0.0
    %782 = vmatpush1.msra.mxu0 0.0
    %783 = vmatprep.mubr.f32.mxu0 0.0
    %784 = vmatmul.mubr.f32.gmra.mrb[0].mxu0 %v296
    %v785 = vpop.f32.mrb[0].mxu0
    %v786 = vadd.f32 %v232, %v785
    %v787 = vpop.f32.mrb[0].mxu0
    %v788 = vadd.f32 %v236, %v787
    %789 = vmatprep.mubr.f32.mxu0 0.0
    %790 = vmatmul.mubr.f32.gmra.mrb[0].mxu0 %v299
    %v791 = vpop.f32.mrb[0].mxu0
    %v792 = vadd.f32 %v232, %v791
    %v793 = vpop.f32.mrb[0].mxu0
    %v794 = vadd.f32 %v236, %v793
    %795 = vmatprep.mubr.f32.mxu0 0.0
    %796 = vmatmul.mubr.f32.gmra.mrb[0].mxu0 %v302
    %v797 = vpop.f32.mrb[0].mxu0
    %v798 = vadd.f32 %v232, %v797
    %v799 = vpop.f32.mrb[0].mxu0
    %v800 = vadd.f32 %v236, %v799
    %801 = vdwg.mxu0
    %802 = vmatprep.subr.mxu0 %v70
    %803 = vmatpush1.msra.mxu0 %v69
    %804 = vmatprep.subr.mxu0 %v91
    %805 = vmatpush1.msra.mxu0 %v90
    %806 = vmatprep.subr.mxu0 %v112
    %807 = vmatpush1.msra.mxu0 %v111
    %808 = vmatprep.subr.mxu0 %v133
    %809 = vmatpush1.msra.mxu0 %v132
    %810 = vmatprep.subr.mxu0 %v154
    %811 = vmatpush1.msra.mxu0 %v153
    %812 = vmatprep.subr.mxu0 %v175
    %813 = vmatpush1.msra.mxu0 %v174
    %814 = vmatprep.subr.mxu0 0.0
    %815 = vmatpush1.msra.mxu0 0.0
    %816 = vmatprep.subr.mxu0 0.0
    %817 = vmatpush1.msra.mxu0 0.0
    %818 = vmatprep.subr.mxu0 0.0
    %819 = vmatpush1.msra.mxu0 0.0
    %820 = vmatprep.subr.mxu0 0.0
    %821 = vmatpush1.msra.mxu0 0.0
    %822 = vmatprep.subr.mxu0 0.0
    %823 = vmatpush1.msra.mxu0 0.0
    %824 = vmatprep.subr.mxu0 0.0
    %825 = vmatpush1.msra.mxu0 0.0
    %826 = vmatprep.subr.mxu0 0.0
    %827 = vmatpush1.msra.mxu0 0.0
    %828 = vmatprep.subr.mxu0 0.0
    %829 = vmatpush1.msra.mxu0 0.0
    %830 = vmatprep.subr.mxu0 0.0
    %831 = vmatpush1.msra.mxu0 0.0
    %832 = vmatprep.subr.mxu0 0.0
    %833 = vmatpush1.msra.mxu0 0.0
    %834 = vmatprep.subr.mxu0 0.0
    %835 = vmatpush1.msra.mxu0 0.0
    %836 = vmatprep.subr.mxu0 0.0
    %837 = vmatpush1.msra.mxu0 0.0
    %838 = vmatprep.subr.mxu0 0.0
    %839 = vmatpush1.msra.mxu0 0.0
    %840 = vmatprep.subr.mxu0 0.0
    %841 = vmatpush1.msra.mxu0 0.0
    %842 = vmatprep.subr.mxu0 0.0
    %843 = vmatpush1.msra.mxu0 0.0
    %844 = vmatprep.subr.mxu0 0.0
    %845 = vmatpush1.msra.mxu0 0.0
    %846 = vmatprep.subr.mxu0 0.0
    %847 = vmatpush1.msra.mxu0 0.0
    %848 = vmatprep.subr.mxu0 0.0
    %849 = vmatpush1.msra.mxu0 0.0
    %850 = vmatprep.subr.mxu0 0.0
    %851 = vmatpush1.msra.mxu0 0.0
    %852 = vmatprep.subr.mxu0 0.0
    %853 = vmatpush1.msra.mxu0 0.0
    %854 = vmatprep.subr.mxu0 0.0
    %855 = vmatpush1.msra.mxu0 0.0
    %856 = vmatprep.subr.mxu0 0.0
    %857 = vmatpush1.msra.mxu0 0.0
    %858 = vmatprep.subr.mxu0 0.0
    %859 = vmatpush1.msra.mxu0 0.0
    %860 = vmatprep.subr.mxu0 0.0
    %861 = vmatpush1.msra.mxu0 0.0
    %862 = vmatprep.subr.mxu0 0.0
    %863 = vmatpush1.msra.mxu0 0.0
    %864 = vmatprep.subr.mxu0 0.0
    %865 = vmatpush1.msra.mxu0 0.0
    %866 = vmatprep.mubr.f32.mxu0 0.0
    %867 = vmatmul.mubr.f32.gmra.mrb[0].mxu0 %v296
    %v868 = vpop.f32.mrb[0].mxu0
    %v869 = vadd.f32 %v240, %v868
    %v870 = vpop.f32.mrb[0].mxu0
    %v871 = vadd.f32 %v244, %v870
    %872 = vmatprep.mubr.f32.mxu0 0.0
    %873 = vmatmul.mubr.f32.gmra.mrb[0].mxu0 %v299
    %v874 = vpop.f32.mrb[0].mxu0
    %v875 = vadd.f32 %v240, %v874
    %v876 = vpop.f32.mrb[0].mxu0
    %v877 = vadd.f32 %v244, %v876
    %878 = vmatprep.mubr.f32.mxu0 0.0
    %879 = vmatmul.mubr.f32.gmra.mrb[0].mxu0 %v302
    %v880 = vpop.f32.mrb[0].mxu0
    %v881 = vadd.f32 %v240, %v880
    %v882 = vpop.f32.mrb[0].mxu0
    %v883 = vadd.f32 %v244, %v882
    %884 = vdwg.mxu0
    %885 = vmatprep.subr.mxu0 %v72
    %886 = vmatpush1.msra.mxu0 %v71
    %887 = vmatprep.subr.mxu0 %v93
    %888 = vmatpush1.msra.mxu0 %v92
    %889 = vmatprep.subr.mxu0 %v114
    %890 = vmatpush1.msra.mxu0 %v113
    %891 = vmatprep.subr.mxu0 %v135
    %892 = vmatpush1.msra.mxu0 %v134
    %893 = vmatprep.subr.mxu0 %v156
    %894 = vmatpush1.msra.mxu0 %v155
    %895 = vmatprep.subr.mxu0 %v177
    %896 = vmatpush1.msra.mxu0 %v176
    %897 = vmatprep.subr.mxu0 0.0
    %898 = vmatpush1.msra.mxu0 0.0
    %899 = vmatprep.subr.mxu0 0.0
    %900 = vmatpush1.msra.mxu0 0.0
    %901 = vmatprep.subr.mxu0 0.0
    %902 = vmatpush1.msra.mxu0 0.0
    %903 = vmatprep.subr.mxu0 0.0
    %904 = vmatpush1.msra.mxu0 0.0
    %905 = vmatprep.subr.mxu0 0.0
    %906 = vmatpush1.msra.mxu0 0.0
    %907 = vmatprep.subr.mxu0 0.0
    %908 = vmatpush1.msra.mxu0 0.0
    %909 = vmatprep.subr.mxu0 0.0
    %910 = vmatpush1.msra.mxu0 0.0
    %911 = vmatprep.subr.mxu0 0.0
    %912 = vmatpush1.msra.mxu0 0.0
    %913 = vmatprep.subr.mxu0 0.0
    %914 = vmatpush1.msra.mxu0 0.0
    %915 = vmatprep.subr.mxu0 0.0
    %916 = vmatpush1.msra.mxu0 0.0
    %917 = vmatprep.subr.mxu0 0.0
    %918 = vmatpush1.msra.mxu0 0.0
    %919 = vmatprep.subr.mxu0 0.0
    %920 = vmatpush1.msra.mxu0 0.0
    %921 = vmatprep.subr.mxu0 0.0
    %922 = vmatpush1.msra.mxu0 0.0
    %923 = vmatprep.subr.mxu0 0.0
    %924 = vmatpush1.msra.mxu0 0.0
    %925 = vmatprep.subr.mxu0 0.0
    %926 = vmatpush1.msra.mxu0 0.0
    %927 = vmatprep.subr.mxu0 0.0
    %928 = vmatpush1.msra.mxu0 0.0
    %929 = vmatprep.subr.mxu0 0.0
    %930 = vmatpush1.msra.mxu0 0.0
    %931 = vmatprep.subr.mxu0 0.0
    %932 = vmatpush1.msra.mxu0 0.0
    %933 = vmatprep.subr.mxu0 0.0
    %934 = vmatpush1.msra.mxu0 0.0
    %935 = vmatprep.subr.mxu0 0.0
    %936 = vmatpush1.msra.mxu0 0.0
    %937 = vmatprep.subr.mxu0 0.0
    %938 = vmatpush1.msra.mxu0 0.0
    %939 = vmatprep.subr.mxu0 0.0
    %940 = vmatpush1.msra.mxu0 0.0
    %941 = vmatprep.subr.mxu0 0.0
    %942 = vmatpush1.msra.mxu0 0.0
    %943 = vmatprep.subr.mxu0 0.0
    %944 = vmatpush1.msra.mxu0 0.0
    %945 = vmatprep.subr.mxu0 0.0
    %946 = vmatpush1.msra.mxu0 0.0
    %947 = vmatprep.subr.mxu0 0.0
    %948 = vmatpush1.msra.mxu0 0.0
    %949 = vmatprep.mubr.f32.mxu0 0.0
    %950 = vmatmul.mubr.f32.gmra.mrb[0].mxu0 %v296
    %v951 = vpop.f32.mrb[0].mxu0
    %v952 = vadd.f32 %v248, %v951
    %v953 = vpop.f32.mrb[0].mxu0
    %v954 = vadd.f32 %v252, %v953
    %955 = vmatprep.mubr.f32.mxu0 0.0
    %956 = vmatmul.mubr.f32.gmra.mrb[0].mxu0 %v299
    %v957 = vpop.f32.mrb[0].mxu0
    %v958 = vadd.f32 %v248, %v957
    %v959 = vpop.f32.mrb[0].mxu0
    %v960 = vadd.f32 %v252, %v959
    %961 = vmatprep.mubr.f32.mxu0 0.0
    %962 = vmatmul.mubr.f32.gmra.mrb[0].mxu0 %v302
    %v963 = vpop.f32.mrb[0].mxu0
    %v964 = vadd.f32 %v248, %v963
    %v965 = vpop.f32.mrb[0].mxu0
    %v966 = vadd.f32 %v252, %v965
    %967 = vdwg.mxu0
    %968 = vmatprep.subr.mxu0 %v74
    %969 = vmatpush1.msra.mxu0 %v73
    %970 = vmatprep.subr.mxu0 %v95
    %971 = vmatpush1.msra.mxu0 %v94
    %972 = vmatprep.subr.mxu0 %v116
    %973 = vmatpush1.msra.mxu0 %v115
    %974 = vmatprep.subr.mxu0 %v137
    %975 = vmatpush1.msra.mxu0 %v136
    %976 = vmatprep.subr.mxu0 %v158
    %977 = vmatpush1.msra.mxu0 %v157
    %978 = vmatprep.subr.mxu0 %v179
    %979 = vmatpush1.msra.mxu0 %v178
    %980 = vmatprep.subr.mxu0 0.0
    %981 = vmatpush1.msra.mxu0 0.0
    %982 = vmatprep.subr.mxu0 0.0
    %983 = vmatpush1.msra.mxu0 0.0
    %984 = vmatprep.subr.mxu0 0.0
    %985 = vmatpush1.msra.mxu0 0.0
    %986 = vmatprep.subr.mxu0 0.0
    %987 = vmatpush1.msra.mxu0 0.0
    %988 = vmatprep.subr.mxu0 0.0
    %989 = vmatpush1.msra.mxu0 0.0
    %990 = vmatprep.subr.mxu0 0.0
    %991 = vmatpush1.msra.mxu0 0.0
    %992 = vmatprep.subr.mxu0 0.0
    %993 = vmatpush1.msra.mxu0 0.0
    %994 = vmatprep.subr.mxu0 0.0
    %995 = vmatpush1.msra.mxu0 0.0
    %996 = vmatprep.subr.mxu0 0.0
    %997 = vmatpush1.msra.mxu0 0.0
    %998 = vmatprep.subr.mxu0 0.0
    %999 = vmatpush1.msra.mxu0 0.0
    %1000 = vmatprep.subr.mxu0 0.0
    %1001 = vmatpush1.msra.mxu0 0.0
    %1002 = vmatprep.subr.mxu0 0.0
    %1003 = vmatpush1.msra.mxu0 0.0
    %1004 = vmatprep.subr.mxu0 0.0
    %1005 = vmatpush1.msra.mxu0 0.0
    %1006 = vmatprep.subr.mxu0 0.0
    %1007 = vmatpush1.msra.mxu0 0.0
    %1008 = vmatprep.subr.mxu0 0.0
    %1009 = vmatpush1.msra.mxu0 0.0
    %1010 = vmatprep.subr.mxu0 0.0
    %1011 = vmatpush1.msra.mxu0 0.0
    %1012 = vmatprep.subr.mxu0 0.0
    %1013 = vmatpush1.msra.mxu0 0.0
    %1014 = vmatprep.subr.mxu0 0.0
    %1015 = vmatpush1.msra.mxu0 0.0
    %1016 = vmatprep.subr.mxu0 0.0
    %1017 = vmatpush1.msra.mxu0 0.0
    %1018 = vmatprep.subr.mxu0 0.0
    %1019 = vmatpush1.msra.mxu0 0.0
    %1020 = vmatprep.subr.mxu0 0.0
    %1021 = vmatpush1.msra.mxu0 0.0
    %1022 = vmatprep.subr.mxu0 0.0
    %1023 = vmatpush1.msra.mxu0 0.0
    %1024 = vmatprep.subr.mxu0 0.0
    %1025 = vmatpush1.msra.mxu0 0.0
    %1026 = vmatprep.subr.mxu0 0.0
    %1027 = vmatpush1.msra.mxu0 0.0
    %1028 = vmatprep.subr.mxu0 0.0
    %1029 = vmatpush1.msra.mxu0 0.0
    %1030 = vmatprep.subr.mxu0 0.0
    %1031 = vmatpush1.msra.mxu0 0.0
    %1032 = vmatprep.mubr.f32.mxu0 0.0
    %1033 = vmatmul.mubr.f32.gmra.mrb[0].mxu0 %v296
    %v1034 = vpop.f32.mrb[0].mxu0
    %v1035 = vadd.f32 %v256, %v1034
    %v1036 = vpop.f32.mrb[0].mxu0
    %v1037 = vadd.f32 %v260, %v1036
    %1038 = vmatprep.mubr.f32.mxu0 0.0
    %1039 = vmatmul.mubr.f32.gmra.mrb[0].mxu0 %v299
    %v1040 = vpop.f32.mrb[0].mxu0
    %v1041 = vadd.f32 %v256, %v1040
    %v1042 = vpop.f32.mrb[0].mxu0
    %v1043 = vadd.f32 %v260, %v1042
    %1044 = vmatprep.mubr.f32.mxu0 0.0
    %1045 = vmatmul.mubr.f32.gmra.mrb[0].mxu0 %v302
    %v1046 = vpop.f32.mrb[0].mxu0
    %v1047 = vadd.f32 %v256, %v1046
    %v1048 = vpop.f32.mrb[0].mxu0
    %v1049 = vadd.f32 %v260, %v1048
    %1050 = vdwg.mxu0
    %1051 = vmatprep.subr.mxu0 %v76
    %1052 = vmatpush1.msra.mxu0 %v75
    %1053 = vmatprep.subr.mxu0 %v97
    %1054 = vmatpush1.msra.mxu0 %v96
    %1055 = vmatprep.subr.mxu0 %v118
    %1056 = vmatpush1.msra.mxu0 %v117
    %1057 = vmatprep.subr.mxu0 %v139
    %1058 = vmatpush1.msra.mxu0 %v138
    %1059 = vmatprep.subr.mxu0 %v160
    %1060 = vmatpush1.msra.mxu0 %v159
    %1061 = vmatprep.subr.mxu0 %v181
    %1062 = vmatpush1.msra.mxu0 %v180
    %1063 = vmatprep.subr.mxu0 0.0
    %1064 = vmatpush1.msra.mxu0 0.0
    %1065 = vmatprep.subr.mxu0 0.0
    %1066 = vmatpush1.msra.mxu0 0.0
    %1067 = vmatprep.subr.mxu0 0.0
    %1068 = vmatpush1.msra.mxu0 0.0
    %1069 = vmatprep.subr.mxu0 0.0
    %1070 = vmatpush1.msra.mxu0 0.0
    %1071 = vmatprep.subr.mxu0 0.0
    %1072 = vmatpush1.msra.mxu0 0.0
    %1073 = vmatprep.subr.mxu0 0.0
    %1074 = vmatpush1.msra.mxu0 0.0
    %1075 = vmatprep.subr.mxu0 0.0
    %1076 = vmatpush1.msra.mxu0 0.0
    %1077 = vmatprep.subr.mxu0 0.0
    %1078 = vmatpush1.msra.mxu0 0.0
    %1079 = vmatprep.subr.mxu0 0.0
    %1080 = vmatpush1.msra.mxu0 0.0
    %1081 = vmatprep.subr.mxu0 0.0
    %1082 = vmatpush1.msra.mxu0 0.0
    %1083 = vmatprep.subr.mxu0 0.0
    %1084 = vmatpush1.msra.mxu0 0.0
    %1085 = vmatprep.subr.mxu0 0.0
    %1086 = vmatpush1.msra.mxu0 0.0
    %1087 = vmatprep.subr.mxu0 0.0
    %1088 = vmatpush1.msra.mxu0 0.0
    %1089 = vmatprep.subr.mxu0 0.0
    %1090 = vmatpush1.msra.mxu0 0.0
    %1091 = vmatprep.subr.mxu0 0.0
    %1092 = vmatpush1.msra.mxu0 0.0
    %1093 = vmatprep.subr.mxu0 0.0
    %1094 = vmatpush1.msra.mxu0 0.0
    %1095 = vmatprep.subr.mxu0 0.0
    %1096 = vmatpush1.msra.mxu0 0.0
    %1097 = vmatprep.subr.mxu0 0.0
    %1098 = vmatpush1.msra.mxu0 0.0
    %1099 = vmatprep.subr.mxu0 0.0
    %1100 = vmatpush1.msra.mxu0 0.0
    %1101 = vmatprep.subr.mxu0 0.0
    %1102 = vmatpush1.msra.mxu0 0.0
    %1103 = vmatprep.subr.mxu0 0.0
    %1104 = vmatpush1.msra.mxu0 0.0
    %1105 = vmatprep.subr.mxu0 0.0
    %1106 = vmatpush1.msra.mxu0 0.0
    %1107 = vmatprep.subr.mxu0 0.0
    %1108 = vmatpush1.msra.mxu0 0.0
    %1109 = vmatprep.subr.mxu0 0.0
    %1110 = vmatpush1.msra.mxu0 0.0
    %1111 = vmatprep.subr.mxu0 0.0
    %1112 = vmatpush1.msra.mxu0 0.0
    %1113 = vmatprep.subr.mxu0 0.0
    %1114 = vmatpush1.msra.mxu0 0.0
    %1115 = vmatprep.mubr.f32.mxu0 0.0
    %1116 = vmatmul.mubr.f32.gmra.mrb[0].mxu0 %v296
    %v1117 = vpop.f32.mrb[0].mxu0
    %v1118 = vadd.f32 %v264, %v1117
    %v1119 = vpop.f32.mrb[0].mxu0
    %v1120 = vadd.f32 %v268, %v1119
    %1121 = vmatprep.mubr.f32.mxu0 0.0
    %1122 = vmatmul.mubr.f32.gmra.mrb[0].mxu0 %v299
    %v1123 = vpop.f32.mrb[0].mxu0
    %v1124 = vadd.f32 %v264, %v1123
    %v1125 = vpop.f32.mrb[0].mxu0
    %v1126 = vadd.f32 %v268, %v1125
    %1127 = vmatprep.mubr.f32.mxu0 0.0
    %1128 = vmatmul.mubr.f32.gmra.mrb[0].mxu0 %v302
    %v1129 = vpop.f32.mrb[0].mxu0
    %v1130 = vadd.f32 %v264, %v1129
    %v1131 = vpop.f32.mrb[0].mxu0
    %v1132 = vadd.f32 %v268, %v1131
    %1133 = vdwg.mxu0
    %1134 = vmatprep.subr.mxu0 0.0
    %1135 = vmatpush1.msra.mxu0 %v77
    %1136 = vmatprep.subr.mxu0 0.0
    %1137 = vmatpush1.msra.mxu0 %v98
    %1138 = vmatprep.subr.mxu0 0.0
    %1139 = vmatpush1.msra.mxu0 %v119
    %1140 = vmatprep.subr.mxu0 0.0
    %1141 = vmatpush1.msra.mxu0 %v140
    %1142 = vmatprep.subr.mxu0 0.0
    %1143 = vmatpush1.msra.mxu0 %v161
    %1144 = vmatprep.subr.mxu0 0.0
    %1145 = vmatpush1.msra.mxu0 %v182
    %1146 = vmatprep.subr.mxu0 0.0
    %1147 = vmatpush1.msra.mxu0 0.0
    %1148 = vmatprep.subr.mxu0 0.0
    %1149 = vmatpush1.msra.mxu0 0.0
    %1150 = vmatprep.subr.mxu0 0.0
    %1151 = vmatpush1.msra.mxu0 0.0
    %1152 = vmatprep.subr.mxu0 0.0
    %1153 = vmatpush1.msra.mxu0 0.0
    %1154 = vmatprep.subr.mxu0 0.0
    %1155 = vmatpush1.msra.mxu0 0.0
    %1156 = vmatprep.subr.mxu0 0.0
    %1157 = vmatpush1.msra.mxu0 0.0
    %1158 = vmatprep.subr.mxu0 0.0
    %1159 = vmatpush1.msra.mxu0 0.0
    %1160 = vmatprep.subr.mxu0 0.0
    %1161 = vmatpush1.msra.mxu0 0.0
    %1162 = vmatprep.subr.mxu0 0.0
    %1163 = vmatpush1.msra.mxu0 0.0
    %1164 = vmatprep.subr.mxu0 0.0
    %1165 = vmatpush1.msra.mxu0 0.0
    %1166 = vmatprep.subr.mxu0 0.0
    %1167 = vmatpush1.msra.mxu0 0.0
    %1168 = vmatprep.subr.mxu0 0.0
    %1169 = vmatpush1.msra.mxu0 0.0
    %1170 = vmatprep.subr.mxu0 0.0
    %1171 = vmatpush1.msra.mxu0 0.0
    %1172 = vmatprep.subr.mxu0 0.0
    %1173 = vmatpush1.msra.mxu0 0.0
    %1174 = vmatprep.subr.mxu0 0.0
    %1175 = vmatpush1.msra.mxu0 0.0
    %1176 = vmatprep.subr.mxu0 0.0
    %1177 = vmatpush1.msra.mxu0 0.0
    %1178 = vmatprep.subr.mxu0 0.0
    %1179 = vmatpush1.msra.mxu0 0.0
    %1180 = vmatprep.subr.mxu0 0.0
    %1181 = vmatpush1.msra.mxu0 0.0
    %1182 = vmatprep.subr.mxu0 0.0
    %1183 = vmatpush1.msra.mxu0 0.0
    %1184 = vmatprep.subr.mxu0 0.0
    %1185 = vmatpush1.msra.mxu0 0.0
    %1186 = vmatprep.subr.mxu0 0.0
    %1187 = vmatpush1.msra.mxu0 0.0
    %1188 = vmatprep.subr.mxu0 0.0
    %1189 = vmatpush1.msra.mxu0 0.0
    %1190 = vmatprep.subr.mxu0 0.0
    %1191 = vmatpush1.msra.mxu0 0.0
    %1192 = vmatprep.subr.mxu0 0.0
    %1193 = vmatpush1.msra.mxu0 0.0
    %1194 = vmatprep.subr.mxu0 0.0
    %1195 = vmatpush1.msra.mxu0 0.0
    %1196 = vmatprep.subr.mxu0 0.0
    %1197 = vmatpush1.msra.mxu0 0.0
    %1198 = vmatprep.mubr.f32.mxu0 0.0
    %1199 = vmatmul.mubr.f32.gmra.mrb[0].mxu0 %v296
    %v1200 = vpop.f32.mrb[0].mxu0
    %v1201 = vadd.f32 %v272, %v1200
    %v1202 = vpop.f32.mrb[0].mxu0
    %1203 = vmatprep.mubr.f32.mxu0 0.0
    %1204 = vmatmul.mubr.f32.gmra.mrb[0].mxu0 %v299
    %v1205 = vpop.f32.mrb[0].mxu0
    %v1206 = vadd.f32 %v272, %v1205
    %v1207 = vpop.f32.mrb[0].mxu0
    %1208 = vmatprep.mubr.f32.mxu0 0.0
    %1209 = vmatmul.mubr.f32.gmra.mrb[0].mxu0 %v302
    %v1210 = vpop.f32.mrb[0].mxu0
    %v1211 = vadd.f32 %v272, %v1210
    %v1212 = vpop.f32.mrb[0].mxu0
    %1213 = vdwg.mxu0
    %1214 = vst [vmem:[#allocation8] sm:$0xff] %v371
    %1215 = vst [vmem:[#allocation8 + $0x8] sm:$0xff] %v373
    %1216 = vst [vmem:[#allocation8 + $0x10] sm:$0xff] %v454
    %1217 = vst [vmem:[#allocation8 + $0x18] sm:$0xff] %v456
    %1218 = vst [vmem:[#allocation8 + $0x20] sm:$0xff] %v537
    %1219 = vst [vmem:[#allocation8 + $0x28] sm:$0xff] %v539
    %1220 = vst [vmem:[#allocation8 + $0x30] sm:$0xff] %v620
    %1221 = vst [vmem:[#allocation8 + $0x38] sm:$0xff] %v622
    %1222 = vst [vmem:[#allocation8 + $0x40] sm:$0xff] %v703
    %1223 = vst [vmem:[#allocation8 + $0x48] sm:$0xff] %v705
    %1224 = vst [vmem:[#allocation8 + $0x50] sm:$0xff] %v786
    %1225 = vst [vmem:[#allocation8 + $0x58] sm:$0xff] %v788
    %1226 = vst [vmem:[#allocation8 + $0x60] sm:$0xff] %v869
    %1227 = vst [vmem:[#allocation8 + $0x68] sm:$0xff] %v871
    %1228 = vst [vmem:[#allocation8 + $0x70] sm:$0xff] %v952
    %1229 = vst [vmem:[#allocation8 + $0x78] sm:$0xff] %v954
    %1230 = vst [vmem:[#allocation8 + $0x80] sm:$0xff] %v1035
    %1231 = vst [vmem:[#allocation8 + $0x88] sm:$0xff] %v1037
    %1232 = vst [vmem:[#allocation8 + $0x90] sm:$0xff] %v1118
    %1233 = vst [vmem:[#allocation8 + $0x98] sm:$0xff] %v1120
    %1234 = vst [vmem:[#allocation8 + $0xa0] sm:$0xff] %v1201
    %1235 = vst [vmem:[#allocation8 + $0xa8] sm:$0xff] %v377
    %1236 = vst [vmem:[#allocation8 + $0xb0] sm:$0xff] %v379
    %1237 = vst [vmem:[#allocation8 + $0xb8] sm:$0xff] %v460
    %1238 = vst [vmem:[#allocation8 + $0xc0] sm:$0xff] %v462
    %1239 = vst [vmem:[#allocation8 + $0xc8] sm:$0xff] %v543
    %1240 = vst [vmem:[#allocation8 + $0xd0] sm:$0xff] %v545
    %1241 = vst [vmem:[#allocation8 + $0xd8] sm:$0xff] %v626
    %1242 = vst [vmem:[#allocation8 + $0xe0] sm:$0xff] %v628
    %1243 = vst [vmem:[#allocation8 + $0xe8] sm:$0xff] %v709
    %1244 = vst [vmem:[#allocation8 + $0xf0] sm:$0xff] %v711
    %1245 = vst [vmem:[#allocation8 + $0xf8] sm:$0xff] %v792
    %1246 = vst [vmem:[#allocation8 + $0x100] sm:$0xff] %v794
    %1247 = vst [vmem:[#allocation8 + $0x108] sm:$0xff] %v875
    %1248 = vst [vmem:[#allocation8 + $0x110] sm:$0xff] %v877
    %1249 = vst [vmem:[#allocation8 + $0x118] sm:$0xff] %v958
    %1250 = vst [vmem:[#allocation8 + $0x120] sm:$0xff] %v960
    %1251 = vst [vmem:[#allocation8 + $0x128] sm:$0xff] %v1041
    %1252 = vst [vmem:[#allocation8 + $0x130] sm:$0xff] %v1043
    %1253 = vst [vmem:[#allocation8 + $0x138] sm:$0xff] %v1124
    %1254 = vst [vmem:[#allocation8 + $0x140] sm:$0xff] %v1126
    %1255 = vst [vmem:[#allocation8 + $0x148] sm:$0xff] %v1206
    %1256 = vst [vmem:[#allocation8 + $0x150] sm:$0x1f] %v383
    %1257 = vst [vmem:[#allocation8 + $0x158] sm:$0x1f] %v385
    %1258 = vst [vmem:[#allocation8 + $0x160] sm:$0x1f] %v466
    %1259 = vst [vmem:[#allocation8 + $0x168] sm:$0x1f] %v468
    %1260 = vst [vmem:[#allocation8 + $0x170] sm:$0x1f] %v549
    %1261 = vst [vmem:[#allocation8 + $0x178] sm:$0x1f] %v551
    %1262 = vst [vmem:[#allocation8 + $0x180] sm:$0x1f] %v632
    %1263 = vst [vmem:[#allocation8 + $0x188] sm:$0x1f] %v634
    %1264 = vst [vmem:[#allocation8 + $0x190] sm:$0x1f] %v715
    %1265 = vst [vmem:[#allocation8 + $0x198] sm:$0x1f] %v717
    %1266 = vst [vmem:[#allocation8 + $0x1a0] sm:$0x1f] %v798
    %1267 = vst [vmem:[#allocation8 + $0x1a8] sm:$0x1f] %v800
    %1268 = vst [vmem:[#allocation8 + $0x1b0] sm:$0x1f] %v881
    %1269 = vst [vmem:[#allocation8 + $0x1b8] sm:$0x1f] %v883
    %1270 = vst [vmem:[#allocation8 + $0x1c0] sm:$0x1f] %v964
    %1271 = vst [vmem:[#allocation8 + $0x1c8] sm:$0x1f] %v966
    %1272 = vst [vmem:[#allocation8 + $0x1d0] sm:$0x1f] %v1047
    %1273 = vst [vmem:[#allocation8 + $0x1d8] sm:$0x1f] %v1049
    %1274 = vst [vmem:[#allocation8 + $0x1e0] sm:$0x1f] %v1130
    %1275 = vst [vmem:[#allocation8 + $0x1e8] sm:$0x1f] %v1132
    %1276 = vst [vmem:[#allocation8 + $0x1f0] sm:$0x1f] %v1211
    // Predicated region
    $region26: #{tpu_custom_call.1} parent=1 // pred_check
      _
    $region27: #{tpu_custom_call.1} parent=1 // pred_check_branch
      %1278 = sbr.rel (0) target = $region29
    $region28: #{tpu_custom_call.1} parent=1 // pred_region
      %s1280 = ssub.s32 8064, 8064
      %1281 = vsyncadd [#allocation4], %s1280
      %s1282 = sshll.u32 [#allocation8], 4
      %s1283 = int_to_ptr.vmem [resolvable:$true] %s1282
      %1288 = dma.vmem_to_hbm [thread:$0]  %s1283, 8064, %s3, [#allocation4], 2688, 2688, 168
    $region29: #{tpu_custom_call.1} parent=1 // pred_fallthru
      _
    // Predicated region
    $region30: #{tpu_custom_call.1} parent=1 // pred_check
      _
    $region31: #{tpu_custom_call.1} parent=1 // pred_check_branch
      %1290 = sbr.rel (0) target = $region33
    $region32: #{tpu_custom_call.1} parent=1 // pred_region
      %1291 = dma.done [#allocation4], 8064
    $region33: #{tpu_custom_call.1} parent=1 // pred_fallthru
      _
    %1292 = vsyncpa [#allocation3], 1
    %1293 = vsyncpa [#allocation6], 1
    %1294 = vsyncpa [#allocation4], 1

</llo_original>
